<compile_context>
chip_gen: v5e
topology: v5e:2x2
jax: 0.10.0
libtpu: 0.0.40
codegen_flags: <defaults>
</compile_context>

<pallas_src>
import jax
import jax.numpy as jnp
from jax import lax
from jax.experimental import pallas as pl
from jax.experimental.pallas import tpu as pltpu

IN_FEATURES = 3 * 64 * 64   # 12288
OUT_FEATURES = 6
TM_DEFAULT = 256            # 256*12288*4B ≈ 12.6 MiB per x buffer; 2 bufs +
                            # weight/bias/out ≈ 26 MiB — fits every generation
                            # under the explicit 48 MiB scoped-VMEM limit.
_MIN_ROWS = 8               # f32 sublane count (block rows must be 8-aligned)
_VMEM_LIMIT = 48 << 20      # < v7x's 64 MiB physical, >> our ~26 MiB footprint


def _round_up(n, m):
    return ((n + m - 1) // m) * m


def _choose_tm(batch, tm_max):
    """Pick the batch-tile size.

    - never larger than the (8-rounded) batch, never smaller than 8 rows;
    - for big batches force >=2 grid tiles so v7x's two TensorCores both get
      work (a single extra tiny step on 1-TC v5e/v6e — negligible).
    """
    tm = max(_MIN_ROWS, min(tm_max, _round_up(batch, _MIN_ROWS)))
    if batch >= 2 * _MIN_ROWS and pl.cdiv(batch, tm) < 2:
        tm = max(_MIN_ROWS, _round_up(pl.cdiv(batch, 2), _MIN_ROWS))
    return tm


def _linear_kernel(x_ref, w_ref, b_ref, o_ref):
    """y = x @ W^T + b for one (tm, K) tile of x; W is (6, K), VMEM-resident."""
    y = lax.dot_general(
        x_ref[...], w_ref[...],
        dimension_numbers=(((1,), (1,)), ((), ())),   # contract both on K
        preferred_element_type=jnp.float32,           # f32 accumulation always
    )
    o_ref[...] = (y + b_ref[...]).astype(o_ref.dtype)


def linear_classifier_forward(x, w, b, *, tm=TM_DEFAULT, compute_dtype=None):
    """
    x : (B, 3, 64, 64) float32   (NCHW, same as the PyTorch module)
    w : (6, 12288)     float32   (torch-native nn.Linear weight layout)
    b : (6,)           float32
    compute_dtype : optionally jnp.bfloat16 to halve HBM traffic on this
                    bandwidth-bound kernel (accuracy tradeoff vs f32 torch).
    returns (B, 6) float32
    """
    B = x.shape[0]
    x2d = x.reshape(B, IN_FEATURES)           # same as torch .view(-1, 12288)
    b2d = b.reshape(1, OUT_FEATURES)

    if compute_dtype is not None:
        x2d = x2d.astype(compute_dtype)
        w = w.astype(compute_dtype)

    tm = _choose_tm(B, tm)
    grid = (pl.cdiv(B, tm),)                  # partial edge block is masked

    itemsize = jnp.dtype(x2d.dtype).itemsize
    cost = pl.CostEstimate(
        flops=2 * B * IN_FEATURES * OUT_FEATURES,
        transcendentals=0,
        bytes_accessed=itemsize * (B * IN_FEATURES + OUT_FEATURES * IN_FEATURES)
        + 4 * (B * OUT_FEATURES + OUT_FEATURES),
    )

    out = pl.pallas_call(
        _linear_kernel,
        out_shape=jax.ShapeDtypeStruct((B, OUT_FEATURES), jnp.float32),
        grid_spec=pltpu.PrefetchScalarGridSpec(
            num_scalar_prefetch=0,
            grid=grid,
            in_specs=[
                # x: one full-K batch tile per grid step
                pl.BlockSpec((tm, IN_FEATURES), lambda m: (m, 0)),
                # weight: whole (6, 12288) array, resident across the grid
                pl.BlockSpec((OUT_FEATURES, IN_FEATURES), lambda m: (0, 0)),
                # bias: tiny, resident
                pl.BlockSpec((1, OUT_FEATURES), lambda m: (0, 0)),
            ],
            out_specs=pl.BlockSpec((tm, OUT_FEATURES), lambda m: (m, 0)),
        ),
        compiler_params=pltpu.CompilerParams(
            dimension_semantics=("parallel",),        # independent batch tiles
            vmem_limit_bytes=_VMEM_LIMIT,             # allow tm=256 on v5e too
        ),
        cost_estimate=cost,
    )(x2d, w, b2d)

    return out


def init_params(key):
    """Deterministic init matching torch.nn.Linear default: U(-1/sqrt(in), 1/sqrt(in))."""
    kw, kb = jax.random.split(key)
    bound = 1.0 / jnp.sqrt(jnp.float32(IN_FEATURES))
    # torch-native layout: weight is (out_features, in_features)
    w = jax.random.uniform(
        kw, (OUT_FEATURES, IN_FEATURES), jnp.float32, minval=-bound, maxval=bound
    )
    b = jax.random.uniform(
        kb, (OUT_FEATURES,), jnp.float32, minval=-bound, maxval=bound
    )
    return w, b


if __name__ == "__main__":
    key = jax.random.PRNGKey(0)
    k_x, k_p = jax.random.split(key)

    B = 2
    x = jax.random.normal(k_x, (B, 3, 64, 64), jnp.float32)
    w, b = init_params(k_p)

    out = jax.block_until_ready(linear_classifier_forward(x, w, b))
    ref = x.reshape(B, IN_FEATURES) @ w.T + b
    assert out.shape == (B, OUT_FEATURES)
    assert jnp.allclose(out, ref, atol=1e-4, rtol=1e-4)

    # Exercise the un-padded / masked partial-edge-block path with a batch that
    # is not a multiple of the tile size.
    B2 = 10
    x2 = jax.random.normal(k_x, (B2, 3, 64, 64), jnp.float32)
    out2 = jax.block_until_ready(linear_classifier_forward(x2, w, b))
    ref2 = x2.reshape(B2, IN_FEATURES) @ w.T + b
    assert out2.shape == (B2, OUT_FEATURES)
    assert jnp.allclose(out2, ref2, atol=1e-4, rtol=1e-4)

    print("KERNEL_OK")
</pallas_src>

<mosaic_0001>
module attributes {stable_mosaic.version = 11 : i64} {
  func.func @_linear_kernel(%arg0: i32, %arg1: memref<8x12288xf32, #tpu.memory_space<vmem>>, %arg2: memref<6x12288xf32, #tpu.memory_space<vmem>>, %arg3: memref<1x6xf32, #tpu.memory_space<vmem>>, %arg4: memref<8x6xf32, #tpu.memory_space<vmem>>) attributes {dimension_semantics = [#tpu.dimension_semantics<parallel>], iteration_bounds = array<i64: 1>, scalar_prefetch = 0 : i64, scratch_operands = 0 : i64, tpu.core_type = #tpu.core_type<tc>, window_params = [{transform_indices = @transform_0, window_bounds = array<i64: 8, 12288>}, {pipeline_mode = #tpu.pipeline_mode<synchronous>, transform_indices = @transform_1, window_bounds = array<i64: 6, 12288>}, {pipeline_mode = #tpu.pipeline_mode<synchronous>, transform_indices = @transform_2, window_bounds = array<i64: 1, 6>}, {transform_indices = @transform_3, window_bounds = array<i64: 8, 6>}]} {
    %c0 = arith.constant 0 : index
    %c0_0 = arith.constant 0 : index
    %0 = vector.load %arg1[%c0, %c0_0] : memref<8x12288xf32, #tpu.memory_space<vmem>>, vector<8x12288xf32>
    %c0_1 = arith.constant 0 : index
    %c0_2 = arith.constant 0 : index
    %1 = vector.load %arg2[%c0_1, %c0_2] : memref<6x12288xf32, #tpu.memory_space<vmem>>, vector<6x12288xf32>
    %cst = arith.constant dense<0.000000e+00> : vector<8x6xf32>
    %2 = tpu.matmul %0, %1, %cst {dimension_numbers = #tpu.dot_dimension_numbers<[1], [1], [0], [0], [0, 0, 1, 0], [], []>} : vector<8x12288xf32>, vector<6x12288xf32>, vector<8x6xf32> -> vector<8x6xf32>
    %c0_3 = arith.constant 0 : index
    %c0_4 = arith.constant 0 : index
    %3 = vector.load %arg3[%c0_3, %c0_4] : memref<1x6xf32, #tpu.memory_space<vmem>>, vector<1x6xf32>
    %4 = vector.broadcast %3 : vector<1x6xf32> to vector<8x6xf32>
    %5 = arith.addf %2, %4 : vector<8x6xf32>
    %c0_5 = arith.constant 0 : index
    %c0_6 = arith.constant 0 : index
    %6 = vector.load %arg4[%c0_5, %c0_6] : memref<8x6xf32, #tpu.memory_space<vmem>>, vector<8x6xf32>
    tpu.vector_store %arg4[%c0_5, %c0_6], %5 {strides = array<i32>} : memref<8x6xf32, #tpu.memory_space<vmem>>, vector<8x6xf32>,
    return
  }
  func.func @transform_0(%arg0: i32) -> (i32, i32) {
    %c0_i32 = arith.constant 0 : i32
    %c0_i32_0 = arith.constant 0 : i32
    return %arg0, %c0_i32 : i32, i32
  }
  func.func @transform_1(%arg0: i32) -> (i32, i32) {
    %c0_i32 = arith.constant 0 : i32
    %c0_i32_0 = arith.constant 0 : i32
    %c0_i32_1 = arith.constant 0 : i32
    return %c0_i32, %c0_i32_0 : i32, i32
  }
  func.func @transform_2(%arg0: i32) -> (i32, i32) {
    %c0_i32 = arith.constant 0 : i32
    %c0_i32_0 = arith.constant 0 : i32
    %c0_i32_1 = arith.constant 0 : i32
    return %c0_i32, %c0_i32_0 : i32, i32
  }
  func.func @transform_3(%arg0: i32) -> (i32, i32) {
    %c0_i32 = arith.constant 0 : i32
    %c0_i32_0 = arith.constant 0 : i32
    return %arg0, %c0_i32 : i32, i32
  }
}

</mosaic_0001>

<llo_original>
// kernel: tpu_custom_call.1
$region0: #{tpu_custom_call.1}
  #allocation0 [shape = 'u32[]', space=smem, size = 0x4, offset = 0x4, fixed_abs, tag = 'smem constant byte address 0x4 - core index']
  #allocation1 [shape = 'u32[72,128]{1,0:T(1,128)}', space=vmem, size = 0x9000, scoped, tag = 'internal scratch']
  %s0 = inlined_call_operand.hbm [shape: f32[2,12288], index: 0, kind: input, shape index: {}]
  %s1 = inlined_call_operand.hbm [shape: f32[6,12288], index: 1, kind: input, shape index: {}]
  %s2 = inlined_call_operand.vmem [shape: f32[1,6], index: 2, kind: input, shape index: {}]
  %s3 = inlined_call_operand.hbm [shape: f32[2,6], index: 3, kind: output, shape index: {}]
  %s4 = sld [smem:[#allocation0]]
  $region30: #{tpu_custom_call.1} parent=0
    _
  %s6 = ssub.s32 1, %s4
  %s7 = scalar_select 0, %s6, %s4
  $region1: #{tpu_custom_call.1} parent=0
    #allocation2 [shape = 'u8[393216]{0}', space=vmem, size = 0x60000, scoped, tag = 'input window, operand 0, single buffered']
    #allocation3 [shape = 's32[1]{0}', space=sflag, size = 0x4, scoped, tag = 'scoped memory for tpu_custom_call.1']
    #allocation4 [shape = 's32[1]{0}', space=sflag, size = 0x4, scoped, tag = 'scoped memory for tpu_custom_call.1']
    #allocation5 [shape = 'u8[393216]{0}', space=vmem, size = 0x60000, scoped, tag = 'input window, operand 1, single buffered']
    #allocation6 [shape = 's32[1]{0}', space=sflag, size = 0x4, scoped, tag = 'scoped memory for tpu_custom_call.1']
    #allocation7 [shape = 'u8[4096]{0}', space=vmem, size = 0x1000, scoped, tag = 'output window, operand 0, single buffered']
    %8 = vsyncpa [#allocation3], 0
    %9 = vsyncpa [#allocation6], 0
    %10 = vsyncpa [#allocation4], 0
    // Predicated region
    $region2: #{tpu_custom_call.1} parent=1 // pred_check
      _
    $region3: #{tpu_custom_call.1} parent=1 // pred_check_branch
      %12 = sbr.rel (0) target = $region5
    $region4: #{tpu_custom_call.1} parent=1 // pred_region
      %14 = vsyncadd [#allocation3], 9216
      %s15 = sshll.u32 %s0, 4
      %s16 = int_to_ptr.hbm [resolvable:$true] %s15
      %s17 = sshll.u32 [#allocation2], 4
      %s18 = int_to_ptr.vmem [resolvable:$true] %s17
      %23 = dma.hbm_to_vmem [thread:$0]  %s16, 3072, %s18, [#allocation3], 3072, 3072, 192
    $region5: #{tpu_custom_call.1} parent=1 // pred_fallthru
      _
    // Predicated region
    $region6: #{tpu_custom_call.1} parent=1 // pred_check
      _
    $region7: #{tpu_custom_call.1} parent=1 // pred_check_branch
      %25 = sbr.rel (0) target = $region9
    $region8: #{tpu_custom_call.1} parent=1 // pred_region
      %27 = vsyncadd [#allocation6], 0
      %s29 = sshll.u32 %s1, 4
      %s30 = int_to_ptr.hbm [resolvable:$true] %s29
      %s31 = sshll.u32 [#allocation5], 4
      %s32 = int_to_ptr.vmem [resolvable:$true] %s31
      %34 = dma.hbm_to_vmem [thread:$0]  %s30, 12288, %s32, [#allocation6]
    $region9: #{tpu_custom_call.1} parent=1 // pred_fallthru
      _
    // Predicated region
    $region10: #{tpu_custom_call.1} parent=1 // pred_check
      _
    $region11: #{tpu_custom_call.1} parent=1 // pred_check_branch
      %36 = sbr.rel (0) target = $region13
    $region12: #{tpu_custom_call.1} parent=1 // pred_region
      _
    $region13: #{tpu_custom_call.1} parent=1 // pred_fallthru
      _
    // Predicated region
    $region14: #{tpu_custom_call.1} parent=1 // pred_check
      _
    $region15: #{tpu_custom_call.1} parent=1 // pred_check_branch
      %38 = sbr.rel (0) target = $region17
    $region16: #{tpu_custom_call.1} parent=1 // pred_region
      %40 = dma.done [#allocation3], 12288
    $region17: #{tpu_custom_call.1} parent=1 // pred_fallthru
      _
    // Predicated region
    $region18: #{tpu_custom_call.1} parent=1 // pred_check
      _
    $region19: #{tpu_custom_call.1} parent=1 // pred_check_branch
      %42 = sbr.rel (0) target = $region21
    $region20: #{tpu_custom_call.1} parent=1 // pred_region
      %44 = dma.done [#allocation6], 12288
    $region21: #{tpu_custom_call.1} parent=1 // pred_fallthru
      _
    %v45 = vld [vmem:[#allocation2] sm:$0xff]
    %v46 = vld [vmem:[#allocation2 + $0x8] sm:$0xff]
    %v47 = vld [vmem:[#allocation2 + $0x10] sm:$0xff]
    %v48 = vld [vmem:[#allocation2 + $0x18] sm:$0xff]
    %v49 = vld [vmem:[#allocation2 + $0x20] sm:$0xff]
    %v50 = vld [vmem:[#allocation2 + $0x28] sm:$0xff]
    %v51 = vld [vmem:[#allocation2 + $0x30] sm:$0xff]
    %v52 = vld [vmem:[#allocation2 + $0x38] sm:$0xff]
    %v53 = vld [vmem:[#allocation2 + $0x40] sm:$0xff]
    %v54 = vld [vmem:[#allocation2 + $0x48] sm:$0xff]
    %v55 = vld [vmem:[#allocation2 + $0x50] sm:$0xff]
    %v56 = vld [vmem:[#allocation2 + $0x58] sm:$0xff]
    %v57 = vld [vmem:[#allocation2 + $0x60] sm:$0xff]
    %v58 = vld [vmem:[#allocation2 + $0x68] sm:$0xff]
    %v59 = vld [vmem:[#allocation2 + $0x70] sm:$0xff]
    %v60 = vld [vmem:[#allocation2 + $0x78] sm:$0xff]
    %v61 = vld [vmem:[#allocation2 + $0x80] sm:$0xff]
    %v62 = vld [vmem:[#allocation2 + $0x88] sm:$0xff]
    %v63 = vld [vmem:[#allocation2 + $0x90] sm:$0xff]
    %v64 = vld [vmem:[#allocation2 + $0x98] sm:$0xff]
    %v65 = vld [vmem:[#allocation2 + $0xa0] sm:$0xff]
    %v66 = vld [vmem:[#allocation2 + $0xa8] sm:$0xff]
    %v67 = vld [vmem:[#allocation2 + $0xb0] sm:$0xff]
    %v68 = vld [vmem:[#allocation2 + $0xb8] sm:$0xff]
    %v69 = vld [vmem:[#allocation2 + $0xc0] sm:$0xff]
    %v70 = vld [vmem:[#allocation2 + $0xc8] sm:$0xff]
    %v71 = vld [vmem:[#allocation2 + $0xd0] sm:$0xff]
    %v72 = vld [vmem:[#allocation2 + $0xd8] sm:$0xff]
    %v73 = vld [vmem:[#allocation2 + $0xe0] sm:$0xff]
    %v74 = vld [vmem:[#allocation2 + $0xe8] sm:$0xff]
    %v75 = vld [vmem:[#allocation2 + $0xf0] sm:$0xff]
    %v76 = vld [vmem:[#allocation2 + $0xf8] sm:$0xff]
    %v77 = vld [vmem:[#allocation2 + $0x100] sm:$0xff]
    %v78 = vld [vmem:[#allocation2 + $0x108] sm:$0xff]
    %v79 = vld [vmem:[#allocation2 + $0x110] sm:$0xff]
    %v80 = vld [vmem:[#allocation2 + $0x118] sm:$0xff]
    %v81 = vld [vmem:[#allocation2 + $0x120] sm:$0xff]
    %v82 = vld [vmem:[#allocation2 + $0x128] sm:$0xff]
    %v83 = vld [vmem:[#allocation2 + $0x130] sm:$0xff]
    %v84 = vld [vmem:[#allocation2 + $0x138] sm:$0xff]
    %v85 = vld [vmem:[#allocation2 + $0x140] sm:$0xff]
    %v86 = vld [vmem:[#allocation2 + $0x148] sm:$0xff]
    %v87 = vld [vmem:[#allocation2 + $0x150] sm:$0xff]
    %v88 = vld [vmem:[#allocation2 + $0x158] sm:$0xff]
    %v89 = vld [vmem:[#allocation2 + $0x160] sm:$0xff]
    %v90 = vld [vmem:[#allocation2 + $0x168] sm:$0xff]
    %v91 = vld [vmem:[#allocation2 + $0x170] sm:$0xff]
    %v92 = vld [vmem:[#allocation2 + $0x178] sm:$0xff]
    %v93 = vld [vmem:[#allocation2 + $0x180] sm:$0xff]
    %v94 = vld [vmem:[#allocation2 + $0x188] sm:$0xff]
    %v95 = vld [vmem:[#allocation2 + $0x190] sm:$0xff]
    %v96 = vld [vmem:[#allocation2 + $0x198] sm:$0xff]
    %v97 = vld [vmem:[#allocation2 + $0x1a0] sm:$0xff]
    %v98 = vld [vmem:[#allocation2 + $0x1a8] sm:$0xff]
    %v99 = vld [vmem:[#allocation2 + $0x1b0] sm:$0xff]
    %v100 = vld [vmem:[#allocation2 + $0x1b8] sm:$0xff]
    %v101 = vld [vmem:[#allocation2 + $0x1c0] sm:$0xff]
    %v102 = vld [vmem:[#allocation2 + $0x1c8] sm:$0xff]
    %v103 = vld [vmem:[#allocation2 + $0x1d0] sm:$0xff]
    %v104 = vld [vmem:[#allocation2 + $0x1d8] sm:$0xff]
    %v105 = vld [vmem:[#allocation2 + $0x1e0] sm:$0xff]
    %v106 = vld [vmem:[#allocation2 + $0x1e8] sm:$0xff]
    %v107 = vld [vmem:[#allocation2 + $0x1f0] sm:$0xff]
    %v108 = vld [vmem:[#allocation2 + $0x1f8] sm:$0xff]
    %v109 = vld [vmem:[#allocation2 + $0x200] sm:$0xff]
    %v110 = vld [vmem:[#allocation2 + $0x208] sm:$0xff]
    %v111 = vld [vmem:[#allocation2 + $0x210] sm:$0xff]
    %v112 = vld [vmem:[#allocation2 + $0x218] sm:$0xff]
    %v113 = vld [vmem:[#allocation2 + $0x220] sm:$0xff]
    %v114 = vld [vmem:[#allocation2 + $0x228] sm:$0xff]
    %v115 = vld [vmem:[#allocation2 + $0x230] sm:$0xff]
    %v116 = vld [vmem:[#allocation2 + $0x238] sm:$0xff]
    %v117 = vld [vmem:[#allocation2 + $0x240] sm:$0xff]
    %v118 = vld [vmem:[#allocation2 + $0x248] sm:$0xff]
    %v119 = vld [vmem:[#allocation2 + $0x250] sm:$0xff]
    %v120 = vld [vmem:[#allocation2 + $0x258] sm:$0xff]
    %v121 = vld [vmem:[#allocation2 + $0x260] sm:$0xff]
    %v122 = vld [vmem:[#allocation2 + $0x268] sm:$0xff]
    %v123 = vld [vmem:[#allocation2 + $0x270] sm:$0xff]
    %v124 = vld [vmem:[#allocation2 + $0x278] sm:$0xff]
    %v125 = vld [vmem:[#allocation2 + $0x280] sm:$0xff]
    %v126 = vld [vmem:[#allocation2 + $0x288] sm:$0xff]
    %v127 = vld [vmem:[#allocation2 + $0x290] sm:$0xff]
    %v128 = vld [vmem:[#allocation2 + $0x298] sm:$0xff]
    %v129 = vld [vmem:[#allocation2 + $0x2a0] sm:$0xff]
    %v130 = vld [vmem:[#allocation2 + $0x2a8] sm:$0xff]
    %v131 = vld [vmem:[#allocation2 + $0x2b0] sm:$0xff]
    %v132 = vld [vmem:[#allocation2 + $0x2b8] sm:$0xff]
    %v133 = vld [vmem:[#allocation2 + $0x2c0] sm:$0xff]
    %v134 = vld [vmem:[#allocation2 + $0x2c8] sm:$0xff]
    %v135 = vld [vmem:[#allocation2 + $0x2d0] sm:$0xff]
    %v136 = vld [vmem:[#allocation2 + $0x2d8] sm:$0xff]
    %v137 = vld [vmem:[#allocation2 + $0x2e0] sm:$0xff]
    %v138 = vld [vmem:[#allocation2 + $0x2e8] sm:$0xff]
    %v139 = vld [vmem:[#allocation2 + $0x2f0] sm:$0xff]
    %v140 = vld [vmem:[#allocation2 + $0x2f8] sm:$0xff]
    %v141 = vld [vmem:[#allocation5] sm:$0x3f]
    %v142 = vld [vmem:[#allocation5 + $0x8] sm:$0x3f]
    %v143 = vld [vmem:[#allocation5 + $0x10] sm:$0x3f]
    %v144 = vld [vmem:[#allocation5 + $0x18] sm:$0x3f]
    %v145 = vld [vmem:[#allocation5 + $0x20] sm:$0x3f]
    %v146 = vld [vmem:[#allocation5 + $0x28] sm:$0x3f]
    %v147 = vld [vmem:[#allocation5 + $0x30] sm:$0x3f]
    %v148 = vld [vmem:[#allocation5 + $0x38] sm:$0x3f]
    %v149 = vld [vmem:[#allocation5 + $0x40] sm:$0x3f]
    %v150 = vld [vmem:[#allocation5 + $0x48] sm:$0x3f]
    %v151 = vld [vmem:[#allocation5 + $0x50] sm:$0x3f]
    %v152 = vld [vmem:[#allocation5 + $0x58] sm:$0x3f]
    %v153 = vld [vmem:[#allocation5 + $0x60] sm:$0x3f]
    %v154 = vld [vmem:[#allocation5 + $0x68] sm:$0x3f]
    %v155 = vld [vmem:[#allocation5 + $0x70] sm:$0x3f]
    %v156 = vld [vmem:[#allocation5 + $0x78] sm:$0x3f]
    %v157 = vld [vmem:[#allocation5 + $0x80] sm:$0x3f]
    %v158 = vld [vmem:[#allocation5 + $0x88] sm:$0x3f]
    %v159 = vld [vmem:[#allocation5 + $0x90] sm:$0x3f]
    %v160 = vld [vmem:[#allocation5 + $0x98] sm:$0x3f]
    %v161 = vld [vmem:[#allocation5 + $0xa0] sm:$0x3f]
    %v162 = vld [vmem:[#allocation5 + $0xa8] sm:$0x3f]
    %v163 = vld [vmem:[#allocation5 + $0xb0] sm:$0x3f]
    %v164 = vld [vmem:[#allocation5 + $0xb8] sm:$0x3f]
    %v165 = vld [vmem:[#allocation5 + $0xc0] sm:$0x3f]
    %v166 = vld [vmem:[#allocation5 + $0xc8] sm:$0x3f]
    %v167 = vld [vmem:[#allocation5 + $0xd0] sm:$0x3f]
    %v168 = vld [vmem:[#allocation5 + $0xd8] sm:$0x3f]
    %v169 = vld [vmem:[#allocation5 + $0xe0] sm:$0x3f]
    %v170 = vld [vmem:[#allocation5 + $0xe8] sm:$0x3f]
    %v171 = vld [vmem:[#allocation5 + $0xf0] sm:$0x3f]
    %v172 = vld [vmem:[#allocation5 + $0xf8] sm:$0x3f]
    %v173 = vld [vmem:[#allocation5 + $0x100] sm:$0x3f]
    %v174 = vld [vmem:[#allocation5 + $0x108] sm:$0x3f]
    %v175 = vld [vmem:[#allocation5 + $0x110] sm:$0x3f]
    %v176 = vld [vmem:[#allocation5 + $0x118] sm:$0x3f]
    %v177 = vld [vmem:[#allocation5 + $0x120] sm:$0x3f]
    %v178 = vld [vmem:[#allocation5 + $0x128] sm:$0x3f]
    %v179 = vld [vmem:[#allocation5 + $0x130] sm:$0x3f]
    %v180 = vld [vmem:[#allocation5 + $0x138] sm:$0x3f]
    %v181 = vld [vmem:[#allocation5 + $0x140] sm:$0x3f]
    %v182 = vld [vmem:[#allocation5 + $0x148] sm:$0x3f]
    %v183 = vld [vmem:[#allocation5 + $0x150] sm:$0x3f]
    %v184 = vld [vmem:[#allocation5 + $0x158] sm:$0x3f]
    %v185 = vld [vmem:[#allocation5 + $0x160] sm:$0x3f]
    %v186 = vld [vmem:[#allocation5 + $0x168] sm:$0x3f]
    %v187 = vld [vmem:[#allocation5 + $0x170] sm:$0x3f]
    %v188 = vld [vmem:[#allocation5 + $0x178] sm:$0x3f]
    %v189 = vld [vmem:[#allocation5 + $0x180] sm:$0x3f]
    %v190 = vld [vmem:[#allocation5 + $0x188] sm:$0x3f]
    %v191 = vld [vmem:[#allocation5 + $0x190] sm:$0x3f]
    %v192 = vld [vmem:[#allocation5 + $0x198] sm:$0x3f]
    %v193 = vld [vmem:[#allocation5 + $0x1a0] sm:$0x3f]
    %v194 = vld [vmem:[#allocation5 + $0x1a8] sm:$0x3f]
    %v195 = vld [vmem:[#allocation5 + $0x1b0] sm:$0x3f]
    %v196 = vld [vmem:[#allocation5 + $0x1b8] sm:$0x3f]
    %v197 = vld [vmem:[#allocation5 + $0x1c0] sm:$0x3f]
    %v198 = vld [vmem:[#allocation5 + $0x1c8] sm:$0x3f]
    %v199 = vld [vmem:[#allocation5 + $0x1d0] sm:$0x3f]
    %v200 = vld [vmem:[#allocation5 + $0x1d8] sm:$0x3f]
    %v201 = vld [vmem:[#allocation5 + $0x1e0] sm:$0x3f]
    %v202 = vld [vmem:[#allocation5 + $0x1e8] sm:$0x3f]
    %v203 = vld [vmem:[#allocation5 + $0x1f0] sm:$0x3f]
    %v204 = vld [vmem:[#allocation5 + $0x1f8] sm:$0x3f]
    %v205 = vld [vmem:[#allocation5 + $0x200] sm:$0x3f]
    %v206 = vld [vmem:[#allocation5 + $0x208] sm:$0x3f]
    %v207 = vld [vmem:[#allocation5 + $0x210] sm:$0x3f]
    %v208 = vld [vmem:[#allocation5 + $0x218] sm:$0x3f]
    %v209 = vld [vmem:[#allocation5 + $0x220] sm:$0x3f]
    %v210 = vld [vmem:[#allocation5 + $0x228] sm:$0x3f]
    %v211 = vld [vmem:[#allocation5 + $0x230] sm:$0x3f]
    %v212 = vld [vmem:[#allocation5 + $0x238] sm:$0x3f]
    %v213 = vld [vmem:[#allocation5 + $0x240] sm:$0x3f]
    %v214 = vld [vmem:[#allocation5 + $0x248] sm:$0x3f]
    %v215 = vld [vmem:[#allocation5 + $0x250] sm:$0x3f]
    %v216 = vld [vmem:[#allocation5 + $0x258] sm:$0x3f]
    %v217 = vld [vmem:[#allocation5 + $0x260] sm:$0x3f]
    %v218 = vld [vmem:[#allocation5 + $0x268] sm:$0x3f]
    %v219 = vld [vmem:[#allocation5 + $0x270] sm:$0x3f]
    %v220 = vld [vmem:[#allocation5 + $0x278] sm:$0x3f]
    %v221 = vld [vmem:[#allocation5 + $0x280] sm:$0x3f]
    %v222 = vld [vmem:[#allocation5 + $0x288] sm:$0x3f]
    %v223 = vld [vmem:[#allocation5 + $0x290] sm:$0x3f]
    %v224 = vld [vmem:[#allocation5 + $0x298] sm:$0x3f]
    %v225 = vld [vmem:[#allocation5 + $0x2a0] sm:$0x3f]
    %v226 = vld [vmem:[#allocation5 + $0x2a8] sm:$0x3f]
    %v227 = vld [vmem:[#allocation5 + $0x2b0] sm:$0x3f]
    %v228 = vld [vmem:[#allocation5 + $0x2b8] sm:$0x3f]
    %v229 = vld [vmem:[#allocation5 + $0x2c0] sm:$0x3f]
    %v230 = vld [vmem:[#allocation5 + $0x2c8] sm:$0x3f]
    %v231 = vld [vmem:[#allocation5 + $0x2d0] sm:$0x3f]
    %v232 = vld [vmem:[#allocation5 + $0x2d8] sm:$0x3f]
    %v233 = vld [vmem:[#allocation5 + $0x2e0] sm:$0x3f]
    %v234 = vld [vmem:[#allocation5 + $0x2e8] sm:$0x3f]
    %v235 = vld [vmem:[#allocation5 + $0x2f0] sm:$0x3f]
    %v236 = vld [vmem:[#allocation5 + $0x2f8] sm:$0x3f]
    %v237 = vld [vmem:[%s2] sm:$0x1]
    %v239 = vperm.slane %v237, 0
    %337 = vst [vmem:[#allocation1] ss:$4 sm:$0xff] %v45
    %s338 = scalar_lea.vmem [#allocation1], 1
    %339 = vst [vmem:[%s338] ss:$4 sm:$0xff] %v69
    %s340 = scalar_lea.vmem [#allocation1], 2
    %341 = vst [vmem:[%s340] ss:$4 sm:$0xff] %v93
    %s342 = scalar_lea.vmem [#allocation1], 3
    %343 = vst [vmem:[%s342] ss:$4 sm:$0xff] %v117
    %s344 = scalar_lea.vmem [#allocation1], 32
    %345 = vst [vmem:[%s344] ss:$4 sm:$0xff] %v46
    %s346 = scalar_lea.vmem [#allocation1], 33
    %347 = vst [vmem:[%s346] ss:$4 sm:$0xff] %v70
    %s348 = scalar_lea.vmem [#allocation1], 34
    %349 = vst [vmem:[%s348] ss:$4 sm:$0xff] %v94
    %s350 = scalar_lea.vmem [#allocation1], 35
    %351 = vst [vmem:[%s350] ss:$4 sm:$0xff] %v118
    %v352 = vld.sshfl [vmem:[#allocation1] sm:$0xff pattern:$0x73625140]
    %v353 = vld.sshfl [vmem:[#allocation1 + $0x8] sm:$0xff pattern:$0x73625140]
    %v354 = vld.sshfl [vmem:[#allocation1 + $0x10] sm:$0xff pattern:$0x73625140]
    %v355 = vld.sshfl [vmem:[#allocation1 + $0x18] sm:$0xff pattern:$0x73625140]
    %v356 = vld.sshfl [vmem:[#allocation1 + $0x20] sm:$0xff pattern:$0x73625140]
    %v357 = vld.sshfl [vmem:[#allocation1 + $0x28] sm:$0xff pattern:$0x73625140]
    %v358 = vld.sshfl [vmem:[#allocation1 + $0x30] sm:$0xff pattern:$0x73625140]
    %v359 = vld.sshfl [vmem:[#allocation1 + $0x38] sm:$0xff pattern:$0x73625140]
    %360 = vst [vmem:[#allocation1] ss:$4 sm:$0xff] %v47
    %361 = vst [vmem:[%s338] ss:$4 sm:$0xff] %v71
    %362 = vst [vmem:[%s340] ss:$4 sm:$0xff] %v95
    %363 = vst [vmem:[%s342] ss:$4 sm:$0xff] %v119
    %364 = vst [vmem:[%s344] ss:$4 sm:$0xff] %v48
    %365 = vst [vmem:[%s346] ss:$4 sm:$0xff] %v72
    %366 = vst [vmem:[%s348] ss:$4 sm:$0xff] %v96
    %367 = vst [vmem:[%s350] ss:$4 sm:$0xff] %v120
    %v368 = vld.sshfl [vmem:[#allocation1] sm:$0xff pattern:$0x73625140]
    %v369 = vld.sshfl [vmem:[#allocation1 + $0x8] sm:$0xff pattern:$0x73625140]
    %v370 = vld.sshfl [vmem:[#allocation1 + $0x10] sm:$0xff pattern:$0x73625140]
    %v371 = vld.sshfl [vmem:[#allocation1 + $0x18] sm:$0xff pattern:$0x73625140]
    %v372 = vld.sshfl [vmem:[#allocation1 + $0x20] sm:$0xff pattern:$0x73625140]
    %v373 = vld.sshfl [vmem:[#allocation1 + $0x28] sm:$0xff pattern:$0x73625140]
    %v374 = vld.sshfl [vmem:[#allocation1 + $0x30] sm:$0xff pattern:$0x73625140]
    %v375 = vld.sshfl [vmem:[#allocation1 + $0x38] sm:$0xff pattern:$0x73625140]
    %376 = vst [vmem:[#allocation1] ss:$4 sm:$0xff] %v49
    %377 = vst [vmem:[%s338] ss:$4 sm:$0xff] %v73
    %378 = vst [vmem:[%s340] ss:$4 sm:$0xff] %v97
    %379 = vst [vmem:[%s342] ss:$4 sm:$0xff] %v121
    %380 = vst [vmem:[%s344] ss:$4 sm:$0xff] %v50
    %381 = vst [vmem:[%s346] ss:$4 sm:$0xff] %v74
    %382 = vst [vmem:[%s348] ss:$4 sm:$0xff] %v98
    %383 = vst [vmem:[%s350] ss:$4 sm:$0xff] %v122
    %v384 = vld.sshfl [vmem:[#allocation1] sm:$0xff pattern:$0x73625140]
    %v385 = vld.sshfl [vmem:[#allocation1 + $0x8] sm:$0xff pattern:$0x73625140]
    %v386 = vld.sshfl [vmem:[#allocation1 + $0x10] sm:$0xff pattern:$0x73625140]
    %v387 = vld.sshfl [vmem:[#allocation1 + $0x18] sm:$0xff pattern:$0x73625140]
    %v388 = vld.sshfl [vmem:[#allocation1 + $0x20] sm:$0xff pattern:$0x73625140]
    %v389 = vld.sshfl [vmem:[#allocation1 + $0x28] sm:$0xff pattern:$0x73625140]
    %v390 = vld.sshfl [vmem:[#allocation1 + $0x30] sm:$0xff pattern:$0x73625140]
    %v391 = vld.sshfl [vmem:[#allocation1 + $0x38] sm:$0xff pattern:$0x73625140]
    %392 = vst [vmem:[#allocation1] ss:$4 sm:$0xff] %v51
    %393 = vst [vmem:[%s338] ss:$4 sm:$0xff] %v75
    %394 = vst [vmem:[%s340] ss:$4 sm:$0xff] %v99
    %395 = vst [vmem:[%s342] ss:$4 sm:$0xff] %v123
    %396 = vst [vmem:[%s344] ss:$4 sm:$0xff] %v52
    %397 = vst [vmem:[%s346] ss:$4 sm:$0xff] %v76
    %398 = vst [vmem:[%s348] ss:$4 sm:$0xff] %v100
    %399 = vst [vmem:[%s350] ss:$4 sm:$0xff] %v124
    %v400 = vld.sshfl [vmem:[#allocation1] sm:$0xff pattern:$0x73625140]
    %v401 = vld.sshfl [vmem:[#allocation1 + $0x8] sm:$0xff pattern:$0x73625140]
    %v402 = vld.sshfl [vmem:[#allocation1 + $0x10] sm:$0xff pattern:$0x73625140]
    %v403 = vld.sshfl [vmem:[#allocation1 + $0x18] sm:$0xff pattern:$0x73625140]
    %v404 = vld.sshfl [vmem:[#allocation1 + $0x20] sm:$0xff pattern:$0x73625140]
    %v405 = vld.sshfl [vmem:[#allocation1 + $0x28] sm:$0xff pattern:$0x73625140]
    %v406 = vld.sshfl [vmem:[#allocation1 + $0x30] sm:$0xff pattern:$0x73625140]
    %v407 = vld.sshfl [vmem:[#allocation1 + $0x38] sm:$0xff pattern:$0x73625140]
    %408 = vst [vmem:[#allocation1] ss:$4 sm:$0xff] %v53
    %409 = vst [vmem:[%s338] ss:$4 sm:$0xff] %v77
    %410 = vst [vmem:[%s340] ss:$4 sm:$0xff] %v101
    %411 = vst [vmem:[%s342] ss:$4 sm:$0xff] %v125
    %412 = vst [vmem:[%s344] ss:$4 sm:$0xff] %v54
    %413 = vst [vmem:[%s346] ss:$4 sm:$0xff] %v78
    %414 = vst [vmem:[%s348] ss:$4 sm:$0xff] %v102
    %415 = vst [vmem:[%s350] ss:$4 sm:$0xff] %v126
    %v416 = vld.sshfl [vmem:[#allocation1] sm:$0xff pattern:$0x73625140]
    %v417 = vld.sshfl [vmem:[#allocation1 + $0x8] sm:$0xff pattern:$0x73625140]
    %v418 = vld.sshfl [vmem:[#allocation1 + $0x10] sm:$0xff pattern:$0x73625140]
    %v419 = vld.sshfl [vmem:[#allocation1 + $0x18] sm:$0xff pattern:$0x73625140]
    %v420 = vld.sshfl [vmem:[#allocation1 + $0x20] sm:$0xff pattern:$0x73625140]
    %v421 = vld.sshfl [vmem:[#allocation1 + $0x28] sm:$0xff pattern:$0x73625140]
    %v422 = vld.sshfl [vmem:[#allocation1 + $0x30] sm:$0xff pattern:$0x73625140]
    %v423 = vld.sshfl [vmem:[#allocation1 + $0x38] sm:$0xff pattern:$0x73625140]
    %424 = vst [vmem:[#allocation1] ss:$4 sm:$0xff] %v55
    %425 = vst [vmem:[%s338] ss:$4 sm:$0xff] %v79
    %426 = vst [vmem:[%s340] ss:$4 sm:$0xff] %v103
    %427 = vst [vmem:[%s342] ss:$4 sm:$0xff] %v127
    %428 = vst [vmem:[%s344] ss:$4 sm:$0xff] %v56
    %429 = vst [vmem:[%s346] ss:$4 sm:$0xff] %v80
    %430 = vst [vmem:[%s348] ss:$4 sm:$0xff] %v104
    %431 = vst [vmem:[%s350] ss:$4 sm:$0xff] %v128
    %v432 = vld.sshfl [vmem:[#allocation1] sm:$0xff pattern:$0x73625140]
    %v433 = vld.sshfl [vmem:[#allocation1 + $0x8] sm:$0xff pattern:$0x73625140]
    %v434 = vld.sshfl [vmem:[#allocation1 + $0x10] sm:$0xff pattern:$0x73625140]
    %v435 = vld.sshfl [vmem:[#allocation1 + $0x18] sm:$0xff pattern:$0x73625140]
    %v436 = vld.sshfl [vmem:[#allocation1 + $0x20] sm:$0xff pattern:$0x73625140]
    %v437 = vld.sshfl [vmem:[#allocation1 + $0x28] sm:$0xff pattern:$0x73625140]
    %v438 = vld.sshfl [vmem:[#allocation1 + $0x30] sm:$0xff pattern:$0x73625140]
    %v439 = vld.sshfl [vmem:[#allocation1 + $0x38] sm:$0xff pattern:$0x73625140]
    %440 = vst [vmem:[#allocation1] ss:$4 sm:$0xff] %v57
    %441 = vst [vmem:[%s338] ss:$4 sm:$0xff] %v81
    %442 = vst [vmem:[%s340] ss:$4 sm:$0xff] %v105
    %443 = vst [vmem:[%s342] ss:$4 sm:$0xff] %v129
    %444 = vst [vmem:[%s344] ss:$4 sm:$0xff] %v58
    %445 = vst [vmem:[%s346] ss:$4 sm:$0xff] %v82
    %446 = vst [vmem:[%s348] ss:$4 sm:$0xff] %v106
    %447 = vst [vmem:[%s350] ss:$4 sm:$0xff] %v130
    %v448 = vld.sshfl [vmem:[#allocation1] sm:$0xff pattern:$0x73625140]
    %v449 = vld.sshfl [vmem:[#allocation1 + $0x8] sm:$0xff pattern:$0x73625140]
    %v450 = vld.sshfl [vmem:[#allocation1 + $0x10] sm:$0xff pattern:$0x73625140]
    %v451 = vld.sshfl [vmem:[#allocation1 + $0x18] sm:$0xff pattern:$0x73625140]
    %v452 = vld.sshfl [vmem:[#allocation1 + $0x20] sm:$0xff pattern:$0x73625140]
    %v453 = vld.sshfl [vmem:[#allocation1 + $0x28] sm:$0xff pattern:$0x73625140]
    %v454 = vld.sshfl [vmem:[#allocation1 + $0x30] sm:$0xff pattern:$0x73625140]
    %v455 = vld.sshfl [vmem:[#allocation1 + $0x38] sm:$0xff pattern:$0x73625140]
    %456 = vst [vmem:[#allocation1] ss:$4 sm:$0xff] %v59
    %457 = vst [vmem:[%s338] ss:$4 sm:$0xff] %v83
    %458 = vst [vmem:[%s340] ss:$4 sm:$0xff] %v107
    %459 = vst [vmem:[%s342] ss:$4 sm:$0xff] %v131
    %460 = vst [vmem:[%s344] ss:$4 sm:$0xff] %v60
    %461 = vst [vmem:[%s346] ss:$4 sm:$0xff] %v84
    %462 = vst [vmem:[%s348] ss:$4 sm:$0xff] %v108
    %463 = vst [vmem:[%s350] ss:$4 sm:$0xff] %v132
    %v464 = vld.sshfl [vmem:[#allocation1] sm:$0xff pattern:$0x73625140]
    %v465 = vld.sshfl [vmem:[#allocation1 + $0x8] sm:$0xff pattern:$0x73625140]
    %v466 = vld.sshfl [vmem:[#allocation1 + $0x10] sm:$0xff pattern:$0x73625140]
    %v467 = vld.sshfl [vmem:[#allocation1 + $0x18] sm:$0xff pattern:$0x73625140]
    %v468 = vld.sshfl [vmem:[#allocation1 + $0x20] sm:$0xff pattern:$0x73625140]
    %v469 = vld.sshfl [vmem:[#allocation1 + $0x28] sm:$0xff pattern:$0x73625140]
    %v470 = vld.sshfl [vmem:[#allocation1 + $0x30] sm:$0xff pattern:$0x73625140]
    %v471 = vld.sshfl [vmem:[#allocation1 + $0x38] sm:$0xff pattern:$0x73625140]
    %472 = vst [vmem:[#allocation1] ss:$4 sm:$0xff] %v61
    %473 = vst [vmem:[%s338] ss:$4 sm:$0xff] %v85
    %474 = vst [vmem:[%s340] ss:$4 sm:$0xff] %v109
    %475 = vst [vmem:[%s342] ss:$4 sm:$0xff] %v133
    %476 = vst [vmem:[%s344] ss:$4 sm:$0xff] %v62
    %477 = vst [vmem:[%s346] ss:$4 sm:$0xff] %v86
    %478 = vst [vmem:[%s348] ss:$4 sm:$0xff] %v110
    %479 = vst [vmem:[%s350] ss:$4 sm:$0xff] %v134
    %v480 = vld.sshfl [vmem:[#allocation1] sm:$0xff pattern:$0x73625140]
    %v481 = vld.sshfl [vmem:[#allocation1 + $0x8] sm:$0xff pattern:$0x73625140]
    %v482 = vld.sshfl [vmem:[#allocation1 + $0x10] sm:$0xff pattern:$0x73625140]
    %v483 = vld.sshfl [vmem:[#allocation1 + $0x18] sm:$0xff pattern:$0x73625140]
    %v484 = vld.sshfl [vmem:[#allocation1 + $0x20] sm:$0xff pattern:$0x73625140]
    %v485 = vld.sshfl [vmem:[#allocation1 + $0x28] sm:$0xff pattern:$0x73625140]
    %v486 = vld.sshfl [vmem:[#allocation1 + $0x30] sm:$0xff pattern:$0x73625140]
    %v487 = vld.sshfl [vmem:[#allocation1 + $0x38] sm:$0xff pattern:$0x73625140]
    %488 = vst [vmem:[#allocation1] ss:$4 sm:$0xff] %v63
    %489 = vst [vmem:[%s338] ss:$4 sm:$0xff] %v87
    %490 = vst [vmem:[%s340] ss:$4 sm:$0xff] %v111
    %491 = vst [vmem:[%s342] ss:$4 sm:$0xff] %v135
    %492 = vst [vmem:[%s344] ss:$4 sm:$0xff] %v64
    %493 = vst [vmem:[%s346] ss:$4 sm:$0xff] %v88
    %494 = vst [vmem:[%s348] ss:$4 sm:$0xff] %v112
    %495 = vst [vmem:[%s350] ss:$4 sm:$0xff] %v136
    %v496 = vld.sshfl [vmem:[#allocation1] sm:$0xff pattern:$0x73625140]
    %v497 = vld.sshfl [vmem:[#allocation1 + $0x8] sm:$0xff pattern:$0x73625140]
    %v498 = vld.sshfl [vmem:[#allocation1 + $0x10] sm:$0xff pattern:$0x73625140]
    %v499 = vld.sshfl [vmem:[#allocation1 + $0x18] sm:$0xff pattern:$0x73625140]
    %v500 = vld.sshfl [vmem:[#allocation1 + $0x20] sm:$0xff pattern:$0x73625140]
    %v501 = vld.sshfl [vmem:[#allocation1 + $0x28] sm:$0xff pattern:$0x73625140]
    %v502 = vld.sshfl [vmem:[#allocation1 + $0x30] sm:$0xff pattern:$0x73625140]
    %v503 = vld.sshfl [vmem:[#allocation1 + $0x38] sm:$0xff pattern:$0x73625140]
    %504 = vst [vmem:[#allocation1] ss:$4 sm:$0xff] %v65
    %505 = vst [vmem:[%s338] ss:$4 sm:$0xff] %v89
    %506 = vst [vmem:[%s340] ss:$4 sm:$0xff] %v113
    %507 = vst [vmem:[%s342] ss:$4 sm:$0xff] %v137
    %508 = vst [vmem:[%s344] ss:$4 sm:$0xff] %v66
    %509 = vst [vmem:[%s346] ss:$4 sm:$0xff] %v90
    %510 = vst [vmem:[%s348] ss:$4 sm:$0xff] %v114
    %511 = vst [vmem:[%s350] ss:$4 sm:$0xff] %v138
    %v512 = vld.sshfl [vmem:[#allocation1] sm:$0xff pattern:$0x73625140]
    %v513 = vld.sshfl [vmem:[#allocation1 + $0x8] sm:$0xff pattern:$0x73625140]
    %v514 = vld.sshfl [vmem:[#allocation1 + $0x10] sm:$0xff pattern:$0x73625140]
    %v515 = vld.sshfl [vmem:[#allocation1 + $0x18] sm:$0xff pattern:$0x73625140]
    %v516 = vld.sshfl [vmem:[#allocation1 + $0x20] sm:$0xff pattern:$0x73625140]
    %v517 = vld.sshfl [vmem:[#allocation1 + $0x28] sm:$0xff pattern:$0x73625140]
    %v518 = vld.sshfl [vmem:[#allocation1 + $0x30] sm:$0xff pattern:$0x73625140]
    %v519 = vld.sshfl [vmem:[#allocation1 + $0x38] sm:$0xff pattern:$0x73625140]
    %520 = vst [vmem:[#allocation1] ss:$4 sm:$0xff] %v67
    %521 = vst [vmem:[%s338] ss:$4 sm:$0xff] %v91
    %522 = vst [vmem:[%s340] ss:$4 sm:$0xff] %v115
    %523 = vst [vmem:[%s342] ss:$4 sm:$0xff] %v139
    %524 = vst [vmem:[%s344] ss:$4 sm:$0xff] %v68
    %525 = vst [vmem:[%s346] ss:$4 sm:$0xff] %v92
    %526 = vst [vmem:[%s348] ss:$4 sm:$0xff] %v116
    %527 = vst [vmem:[%s350] ss:$4 sm:$0xff] %v140
    %v528 = vld.sshfl [vmem:[#allocation1] sm:$0xff pattern:$0x73625140]
    %v529 = vld.sshfl [vmem:[#allocation1 + $0x8] sm:$0xff pattern:$0x73625140]
    %v530 = vld.sshfl [vmem:[#allocation1 + $0x10] sm:$0xff pattern:$0x73625140]
    %v531 = vld.sshfl [vmem:[#allocation1 + $0x18] sm:$0xff pattern:$0x73625140]
    %v532 = vld.sshfl [vmem:[#allocation1 + $0x20] sm:$0xff pattern:$0x73625140]
    %v533 = vld.sshfl [vmem:[#allocation1 + $0x28] sm:$0xff pattern:$0x73625140]
    %v534 = vld.sshfl [vmem:[#allocation1 + $0x30] sm:$0xff pattern:$0x73625140]
    %v535 = vld.sshfl [vmem:[#allocation1 + $0x38] sm:$0xff pattern:$0x73625140]
    %632 = vmatpush.xpose.msra.mxu0 0.0
    %633 = vmatpush.xpose.msra.mxu0 0.0
    %634 = vmatpush.xpose.msra.mxu0 0.0
    %635 = vmatpush.xpose.msra.mxu0 0.0
    %636 = vmatpush.xpose.msra.mxu0 0.0
    %637 = vmatpush.xpose.msra.mxu0 0.0
    %638 = vmatpush.xpose.msra.mxu0 0.0
    %639 = vmatpush.xpose.msra.mxu0 0.0
    %640 = vmatpush.xpose.msra.mxu0 0.0
    %641 = vmatpush.xpose.msra.mxu0 0.0
    %642 = vmatpush.xpose.msra.mxu0 0.0
    %643 = vmatpush.xpose.msra.mxu0 0.0
    %644 = vmatpush.xpose.msra.mxu0 0.0
    %645 = vmatpush.xpose.msra.mxu0 0.0
    %646 = vmatpush.xpose.msra.mxu0 0.0
    %647 = vmatpush.xpose.msra.mxu0 %v141
    %648 = vmatmul.f32.gmra.mxu0 %v352
    %v649 = vpop.f32.mrf.mxu0
    %v650 = vadd.f32 %v239, %v649
    %651 = vdwg.mxu0
    %652 = vmatpush.xpose.msra.mxu0 0.0
    %653 = vmatpush.xpose.msra.mxu0 0.0
    %654 = vmatpush.xpose.msra.mxu0 0.0
    %655 = vmatpush.xpose.msra.mxu0 0.0
    %656 = vmatpush.xpose.msra.mxu0 0.0
    %657 = vmatpush.xpose.msra.mxu0 0.0
    %658 = vmatpush.xpose.msra.mxu0 0.0
    %659 = vmatpush.xpose.msra.mxu0 0.0
    %660 = vmatpush.xpose.msra.mxu0 0.0
    %661 = vmatpush.xpose.msra.mxu0 0.0
    %662 = vmatpush.xpose.msra.mxu0 0.0
    %663 = vmatpush.xpose.msra.mxu0 0.0
    %664 = vmatpush.xpose.msra.mxu0 0.0
    %665 = vmatpush.xpose.msra.mxu0 0.0
    %666 = vmatpush.xpose.msra.mxu0 0.0
    %667 = vmatpush.xpose.msra.mxu0 %v142
    %668 = vmatmul.f32.gmra.mxu0 %v353
    %v669 = vpop.f32.mrf.mxu0
    %v670 = vadd.f32 %v650, %v669
    %671 = vdwg.mxu0
    %672 = vmatpush.xpose.msra.mxu0 0.0
    %673 = vmatpush.xpose.msra.mxu0 0.0
    %674 = vmatpush.xpose.msra.mxu0 0.0
    %675 = vmatpush.xpose.msra.mxu0 0.0
    %676 = vmatpush.xpose.msra.mxu0 0.0
    %677 = vmatpush.xpose.msra.mxu0 0.0
    %678 = vmatpush.xpose.msra.mxu0 0.0
    %679 = vmatpush.xpose.msra.mxu0 0.0
    %680 = vmatpush.xpose.msra.mxu0 0.0
    %681 = vmatpush.xpose.msra.mxu0 0.0
    %682 = vmatpush.xpose.msra.mxu0 0.0
    %683 = vmatpush.xpose.msra.mxu0 0.0
    %684 = vmatpush.xpose.msra.mxu0 0.0
    %685 = vmatpush.xpose.msra.mxu0 0.0
    %686 = vmatpush.xpose.msra.mxu0 0.0
    %687 = vmatpush.xpose.msra.mxu0 %v143
    %688 = vmatmul.f32.gmra.mxu0 %v354
    %v689 = vpop.f32.mrf.mxu0
    %v690 = vadd.f32 %v670, %v689
    %691 = vdwg.mxu0
    %692 = vmatpush.xpose.msra.mxu0 0.0
    %693 = vmatpush.xpose.msra.mxu0 0.0
    %694 = vmatpush.xpose.msra.mxu0 0.0
    %695 = vmatpush.xpose.msra.mxu0 0.0
    %696 = vmatpush.xpose.msra.mxu0 0.0
    %697 = vmatpush.xpose.msra.mxu0 0.0
    %698 = vmatpush.xpose.msra.mxu0 0.0
    %699 = vmatpush.xpose.msra.mxu0 0.0
    %700 = vmatpush.xpose.msra.mxu0 0.0
    %701 = vmatpush.xpose.msra.mxu0 0.0
    %702 = vmatpush.xpose.msra.mxu0 0.0
    %703 = vmatpush.xpose.msra.mxu0 0.0
    %704 = vmatpush.xpose.msra.mxu0 0.0
    %705 = vmatpush.xpose.msra.mxu0 0.0
    %706 = vmatpush.xpose.msra.mxu0 0.0
    %707 = vmatpush.xpose.msra.mxu0 %v144
    %708 = vmatmul.f32.gmra.mxu0 %v355
    %v709 = vpop.f32.mrf.mxu0
    %v710 = vadd.f32 %v690, %v709
    %711 = vdwg.mxu0
    %712 = vmatpush.xpose.msra.mxu0 0.0
    %713 = vmatpush.xpose.msra.mxu0 0.0
    %714 = vmatpush.xpose.msra.mxu0 0.0
    %715 = vmatpush.xpose.msra.mxu0 0.0
    %716 = vmatpush.xpose.msra.mxu0 0.0
    %717 = vmatpush.xpose.msra.mxu0 0.0
    %718 = vmatpush.xpose.msra.mxu0 0.0
    %719 = vmatpush.xpose.msra.mxu0 0.0
    %720 = vmatpush.xpose.msra.mxu0 0.0
    %721 = vmatpush.xpose.msra.mxu0 0.0
    %722 = vmatpush.xpose.msra.mxu0 0.0
    %723 = vmatpush.xpose.msra.mxu0 0.0
    %724 = vmatpush.xpose.msra.mxu0 0.0
    %725 = vmatpush.xpose.msra.mxu0 0.0
    %726 = vmatpush.xpose.msra.mxu0 0.0
    %727 = vmatpush.xpose.msra.mxu0 %v145
    %728 = vmatmul.f32.gmra.mxu0 %v356
    %v729 = vpop.f32.mrf.mxu0
    %v730 = vadd.f32 %v710, %v729
    %731 = vdwg.mxu0
    %732 = vmatpush.xpose.msra.mxu0 0.0
    %733 = vmatpush.xpose.msra.mxu0 0.0
    %734 = vmatpush.xpose.msra.mxu0 0.0
    %735 = vmatpush.xpose.msra.mxu0 0.0
    %736 = vmatpush.xpose.msra.mxu0 0.0
    %737 = vmatpush.xpose.msra.mxu0 0.0
    %738 = vmatpush.xpose.msra.mxu0 0.0
    %739 = vmatpush.xpose.msra.mxu0 0.0
    %740 = vmatpush.xpose.msra.mxu0 0.0
    %741 = vmatpush.xpose.msra.mxu0 0.0
    %742 = vmatpush.xpose.msra.mxu0 0.0
    %743 = vmatpush.xpose.msra.mxu0 0.0
    %744 = vmatpush.xpose.msra.mxu0 0.0
    %745 = vmatpush.xpose.msra.mxu0 0.0
    %746 = vmatpush.xpose.msra.mxu0 0.0
    %747 = vmatpush.xpose.msra.mxu0 %v146
    %748 = vmatmul.f32.gmra.mxu0 %v357
    %v749 = vpop.f32.mrf.mxu0
    %v750 = vadd.f32 %v730, %v749
    %751 = vdwg.mxu0
    %752 = vmatpush.xpose.msra.mxu0 0.0
    %753 = vmatpush.xpose.msra.mxu0 0.0
    %754 = vmatpush.xpose.msra.mxu0 0.0
    %755 = vmatpush.xpose.msra.mxu0 0.0
    %756 = vmatpush.xpose.msra.mxu0 0.0
    %757 = vmatpush.xpose.msra.mxu0 0.0
    %758 = vmatpush.xpose.msra.mxu0 0.0
    %759 = vmatpush.xpose.msra.mxu0 0.0
    %760 = vmatpush.xpose.msra.mxu0 0.0
    %761 = vmatpush.xpose.msra.mxu0 0.0
    %762 = vmatpush.xpose.msra.mxu0 0.0
    %763 = vmatpush.xpose.msra.mxu0 0.0
    %764 = vmatpush.xpose.msra.mxu0 0.0
    %765 = vmatpush.xpose.msra.mxu0 0.0
    %766 = vmatpush.xpose.msra.mxu0 0.0
    %767 = vmatpush.xpose.msra.mxu0 %v147
    %768 = vmatmul.f32.gmra.mxu0 %v358
    %v769 = vpop.f32.mrf.mxu0
    %v770 = vadd.f32 %v750, %v769
    %771 = vdwg.mxu0
    %772 = vmatpush.xpose.msra.mxu0 0.0
    %773 = vmatpush.xpose.msra.mxu0 0.0
    %774 = vmatpush.xpose.msra.mxu0 0.0
    %775 = vmatpush.xpose.msra.mxu0 0.0
    %776 = vmatpush.xpose.msra.mxu0 0.0
    %777 = vmatpush.xpose.msra.mxu0 0.0
    %778 = vmatpush.xpose.msra.mxu0 0.0
    %779 = vmatpush.xpose.msra.mxu0 0.0
    %780 = vmatpush.xpose.msra.mxu0 0.0
    %781 = vmatpush.xpose.msra.mxu0 0.0
    %782 = vmatpush.xpose.msra.mxu0 0.0
    %783 = vmatpush.xpose.msra.mxu0 0.0
    %784 = vmatpush.xpose.msra.mxu0 0.0
    %785 = vmatpush.xpose.msra.mxu0 0.0
    %786 = vmatpush.xpose.msra.mxu0 0.0
    %787 = vmatpush.xpose.msra.mxu0 %v148
    %788 = vmatmul.f32.gmra.mxu0 %v359
    %v789 = vpop.f32.mrf.mxu0
    %v790 = vadd.f32 %v770, %v789
    %791 = vdwg.mxu0
    %792 = vmatpush.xpose.msra.mxu0 0.0
    %793 = vmatpush.xpose.msra.mxu0 0.0
    %794 = vmatpush.xpose.msra.mxu0 0.0
    %795 = vmatpush.xpose.msra.mxu0 0.0
    %796 = vmatpush.xpose.msra.mxu0 0.0
    %797 = vmatpush.xpose.msra.mxu0 0.0
    %798 = vmatpush.xpose.msra.mxu0 0.0
    %799 = vmatpush.xpose.msra.mxu0 0.0
    %800 = vmatpush.xpose.msra.mxu0 0.0
    %801 = vmatpush.xpose.msra.mxu0 0.0
    %802 = vmatpush.xpose.msra.mxu0 0.0
    %803 = vmatpush.xpose.msra.mxu0 0.0
    %804 = vmatpush.xpose.msra.mxu0 0.0
    %805 = vmatpush.xpose.msra.mxu0 0.0
    %806 = vmatpush.xpose.msra.mxu0 0.0
    %807 = vmatpush.xpose.msra.mxu0 %v149
    %808 = vmatmul.f32.gmra.mxu0 %v368
    %v809 = vpop.f32.mrf.mxu0
    %v810 = vadd.f32 %v790, %v809
    %811 = vdwg.mxu0
    %812 = vmatpush.xpose.msra.mxu0 0.0
    %813 = vmatpush.xpose.msra.mxu0 0.0
    %814 = vmatpush.xpose.msra.mxu0 0.0
    %815 = vmatpush.xpose.msra.mxu0 0.0
    %816 = vmatpush.xpose.msra.mxu0 0.0
    %817 = vmatpush.xpose.msra.mxu0 0.0
    %818 = vmatpush.xpose.msra.mxu0 0.0
    %819 = vmatpush.xpose.msra.mxu0 0.0
    %820 = vmatpush.xpose.msra.mxu0 0.0
    %821 = vmatpush.xpose.msra.mxu0 0.0
    %822 = vmatpush.xpose.msra.mxu0 0.0
    %823 = vmatpush.xpose.msra.mxu0 0.0
    %824 = vmatpush.xpose.msra.mxu0 0.0
    %825 = vmatpush.xpose.msra.mxu0 0.0
    %826 = vmatpush.xpose.msra.mxu0 0.0
    %827 = vmatpush.xpose.msra.mxu0 %v150
    %828 = vmatmul.f32.gmra.mxu0 %v369
    %v829 = vpop.f32.mrf.mxu0
    %v830 = vadd.f32 %v810, %v829
    %831 = vdwg.mxu0
    %832 = vmatpush.xpose.msra.mxu0 0.0
    %833 = vmatpush.xpose.msra.mxu0 0.0
    %834 = vmatpush.xpose.msra.mxu0 0.0
    %835 = vmatpush.xpose.msra.mxu0 0.0
    %836 = vmatpush.xpose.msra.mxu0 0.0
    %837 = vmatpush.xpose.msra.mxu0 0.0
    %838 = vmatpush.xpose.msra.mxu0 0.0
    %839 = vmatpush.xpose.msra.mxu0 0.0
    %840 = vmatpush.xpose.msra.mxu0 0.0
    %841 = vmatpush.xpose.msra.mxu0 0.0
    %842 = vmatpush.xpose.msra.mxu0 0.0
    %843 = vmatpush.xpose.msra.mxu0 0.0
    %844 = vmatpush.xpose.msra.mxu0 0.0
    %845 = vmatpush.xpose.msra.mxu0 0.0
    %846 = vmatpush.xpose.msra.mxu0 0.0
    %847 = vmatpush.xpose.msra.mxu0 %v151
    %848 = vmatmul.f32.gmra.mxu0 %v370
    %v849 = vpop.f32.mrf.mxu0
    %v850 = vadd.f32 %v830, %v849
    %851 = vdwg.mxu0
    %852 = vmatpush.xpose.msra.mxu0 0.0
    %853 = vmatpush.xpose.msra.mxu0 0.0
    %854 = vmatpush.xpose.msra.mxu0 0.0
    %855 = vmatpush.xpose.msra.mxu0 0.0
    %856 = vmatpush.xpose.msra.mxu0 0.0
    %857 = vmatpush.xpose.msra.mxu0 0.0
    %858 = vmatpush.xpose.msra.mxu0 0.0
    %859 = vmatpush.xpose.msra.mxu0 0.0
    %860 = vmatpush.xpose.msra.mxu0 0.0
    %861 = vmatpush.xpose.msra.mxu0 0.0
    %862 = vmatpush.xpose.msra.mxu0 0.0
    %863 = vmatpush.xpose.msra.mxu0 0.0
    %864 = vmatpush.xpose.msra.mxu0 0.0
    %865 = vmatpush.xpose.msra.mxu0 0.0
    %866 = vmatpush.xpose.msra.mxu0 0.0
    %867 = vmatpush.xpose.msra.mxu0 %v152
    %868 = vmatmul.f32.gmra.mxu0 %v371
    %v869 = vpop.f32.mrf.mxu0
    %v870 = vadd.f32 %v850, %v869
    %871 = vdwg.mxu0
    %872 = vmatpush.xpose.msra.mxu0 0.0
    %873 = vmatpush.xpose.msra.mxu0 0.0
    %874 = vmatpush.xpose.msra.mxu0 0.0
    %875 = vmatpush.xpose.msra.mxu0 0.0
    %876 = vmatpush.xpose.msra.mxu0 0.0
    %877 = vmatpush.xpose.msra.mxu0 0.0
    %878 = vmatpush.xpose.msra.mxu0 0.0
    %879 = vmatpush.xpose.msra.mxu0 0.0
    %880 = vmatpush.xpose.msra.mxu0 0.0
    %881 = vmatpush.xpose.msra.mxu0 0.0
    %882 = vmatpush.xpose.msra.mxu0 0.0
    %883 = vmatpush.xpose.msra.mxu0 0.0
    %884 = vmatpush.xpose.msra.mxu0 0.0
    %885 = vmatpush.xpose.msra.mxu0 0.0
    %886 = vmatpush.xpose.msra.mxu0 0.0
    %887 = vmatpush.xpose.msra.mxu0 %v153
    %888 = vmatmul.f32.gmra.mxu0 %v372
    %v889 = vpop.f32.mrf.mxu0
    %v890 = vadd.f32 %v870, %v889
    %891 = vdwg.mxu0
    %892 = vmatpush.xpose.msra.mxu0 0.0
    %893 = vmatpush.xpose.msra.mxu0 0.0
    %894 = vmatpush.xpose.msra.mxu0 0.0
    %895 = vmatpush.xpose.msra.mxu0 0.0
    %896 = vmatpush.xpose.msra.mxu0 0.0
    %897 = vmatpush.xpose.msra.mxu0 0.0
    %898 = vmatpush.xpose.msra.mxu0 0.0
    %899 = vmatpush.xpose.msra.mxu0 0.0
    %900 = vmatpush.xpose.msra.mxu0 0.0
    %901 = vmatpush.xpose.msra.mxu0 0.0
    %902 = vmatpush.xpose.msra.mxu0 0.0
    %903 = vmatpush.xpose.msra.mxu0 0.0
    %904 = vmatpush.xpose.msra.mxu0 0.0
    %905 = vmatpush.xpose.msra.mxu0 0.0
    %906 = vmatpush.xpose.msra.mxu0 0.0
    %907 = vmatpush.xpose.msra.mxu0 %v154
    %908 = vmatmul.f32.gmra.mxu0 %v373
    %v909 = vpop.f32.mrf.mxu0
    %v910 = vadd.f32 %v890, %v909
    %911 = vdwg.mxu0
    %912 = vmatpush.xpose.msra.mxu0 0.0
    %913 = vmatpush.xpose.msra.mxu0 0.0
    %914 = vmatpush.xpose.msra.mxu0 0.0
    %915 = vmatpush.xpose.msra.mxu0 0.0
    %916 = vmatpush.xpose.msra.mxu0 0.0
    %917 = vmatpush.xpose.msra.mxu0 0.0
    %918 = vmatpush.xpose.msra.mxu0 0.0
    %919 = vmatpush.xpose.msra.mxu0 0.0
    %920 = vmatpush.xpose.msra.mxu0 0.0
    %921 = vmatpush.xpose.msra.mxu0 0.0
    %922 = vmatpush.xpose.msra.mxu0 0.0
    %923 = vmatpush.xpose.msra.mxu0 0.0
    %924 = vmatpush.xpose.msra.mxu0 0.0
    %925 = vmatpush.xpose.msra.mxu0 0.0
    %926 = vmatpush.xpose.msra.mxu0 0.0
    %927 = vmatpush.xpose.msra.mxu0 %v155
    %928 = vmatmul.f32.gmra.mxu0 %v374
    %v929 = vpop.f32.mrf.mxu0
    %v930 = vadd.f32 %v910, %v929
    %931 = vdwg.mxu0
    %932 = vmatpush.xpose.msra.mxu0 0.0
    %933 = vmatpush.xpose.msra.mxu0 0.0
    %934 = vmatpush.xpose.msra.mxu0 0.0
    %935 = vmatpush.xpose.msra.mxu0 0.0
    %936 = vmatpush.xpose.msra.mxu0 0.0
    %937 = vmatpush.xpose.msra.mxu0 0.0
    %938 = vmatpush.xpose.msra.mxu0 0.0
    %939 = vmatpush.xpose.msra.mxu0 0.0
    %940 = vmatpush.xpose.msra.mxu0 0.0
    %941 = vmatpush.xpose.msra.mxu0 0.0
    %942 = vmatpush.xpose.msra.mxu0 0.0
    %943 = vmatpush.xpose.msra.mxu0 0.0
    %944 = vmatpush.xpose.msra.mxu0 0.0
    %945 = vmatpush.xpose.msra.mxu0 0.0
    %946 = vmatpush.xpose.msra.mxu0 0.0
    %947 = vmatpush.xpose.msra.mxu0 %v156
    %948 = vmatmul.f32.gmra.mxu0 %v375
    %v949 = vpop.f32.mrf.mxu0
    %v950 = vadd.f32 %v930, %v949
    %951 = vdwg.mxu0
    %952 = vmatpush.xpose.msra.mxu0 0.0
    %953 = vmatpush.xpose.msra.mxu0 0.0
    %954 = vmatpush.xpose.msra.mxu0 0.0
    %955 = vmatpush.xpose.msra.mxu0 0.0
    %956 = vmatpush.xpose.msra.mxu0 0.0
    %957 = vmatpush.xpose.msra.mxu0 0.0
    %958 = vmatpush.xpose.msra.mxu0 0.0
    %959 = vmatpush.xpose.msra.mxu0 0.0
    %960 = vmatpush.xpose.msra.mxu0 0.0
    %961 = vmatpush.xpose.msra.mxu0 0.0
    %962 = vmatpush.xpose.msra.mxu0 0.0
    %963 = vmatpush.xpose.msra.mxu0 0.0
    %964 = vmatpush.xpose.msra.mxu0 0.0
    %965 = vmatpush.xpose.msra.mxu0 0.0
    %966 = vmatpush.xpose.msra.mxu0 0.0
    %967 = vmatpush.xpose.msra.mxu0 %v157
    %968 = vmatmul.f32.gmra.mxu0 %v384
    %v969 = vpop.f32.mrf.mxu0
    %v970 = vadd.f32 %v950, %v969
    %971 = vdwg.mxu0
    %972 = vmatpush.xpose.msra.mxu0 0.0
    %973 = vmatpush.xpose.msra.mxu0 0.0
    %974 = vmatpush.xpose.msra.mxu0 0.0
    %975 = vmatpush.xpose.msra.mxu0 0.0
    %976 = vmatpush.xpose.msra.mxu0 0.0
    %977 = vmatpush.xpose.msra.mxu0 0.0
    %978 = vmatpush.xpose.msra.mxu0 0.0
    %979 = vmatpush.xpose.msra.mxu0 0.0
    %980 = vmatpush.xpose.msra.mxu0 0.0
    %981 = vmatpush.xpose.msra.mxu0 0.0
    %982 = vmatpush.xpose.msra.mxu0 0.0
    %983 = vmatpush.xpose.msra.mxu0 0.0
    %984 = vmatpush.xpose.msra.mxu0 0.0
    %985 = vmatpush.xpose.msra.mxu0 0.0
    %986 = vmatpush.xpose.msra.mxu0 0.0
    %987 = vmatpush.xpose.msra.mxu0 %v158
    %988 = vmatmul.f32.gmra.mxu0 %v385
    %v989 = vpop.f32.mrf.mxu0
    %v990 = vadd.f32 %v970, %v989
    %991 = vdwg.mxu0
    %992 = vmatpush.xpose.msra.mxu0 0.0
    %993 = vmatpush.xpose.msra.mxu0 0.0
    %994 = vmatpush.xpose.msra.mxu0 0.0
    %995 = vmatpush.xpose.msra.mxu0 0.0
    %996 = vmatpush.xpose.msra.mxu0 0.0
    %997 = vmatpush.xpose.msra.mxu0 0.0
    %998 = vmatpush.xpose.msra.mxu0 0.0
    %999 = vmatpush.xpose.msra.mxu0 0.0
    %1000 = vmatpush.xpose.msra.mxu0 0.0
    %1001 = vmatpush.xpose.msra.mxu0 0.0
    %1002 = vmatpush.xpose.msra.mxu0 0.0
    %1003 = vmatpush.xpose.msra.mxu0 0.0
    %1004 = vmatpush.xpose.msra.mxu0 0.0
    %1005 = vmatpush.xpose.msra.mxu0 0.0
    %1006 = vmatpush.xpose.msra.mxu0 0.0
    %1007 = vmatpush.xpose.msra.mxu0 %v159
    %1008 = vmatmul.f32.gmra.mxu0 %v386
    %v1009 = vpop.f32.mrf.mxu0
    %v1010 = vadd.f32 %v990, %v1009
    %1011 = vdwg.mxu0
    %1012 = vmatpush.xpose.msra.mxu0 0.0
    %1013 = vmatpush.xpose.msra.mxu0 0.0
    %1014 = vmatpush.xpose.msra.mxu0 0.0
    %1015 = vmatpush.xpose.msra.mxu0 0.0
    %1016 = vmatpush.xpose.msra.mxu0 0.0
    %1017 = vmatpush.xpose.msra.mxu0 0.0
    %1018 = vmatpush.xpose.msra.mxu0 0.0
    %1019 = vmatpush.xpose.msra.mxu0 0.0
    %1020 = vmatpush.xpose.msra.mxu0 0.0
    %1021 = vmatpush.xpose.msra.mxu0 0.0
    %1022 = vmatpush.xpose.msra.mxu0 0.0
    %1023 = vmatpush.xpose.msra.mxu0 0.0
    %1024 = vmatpush.xpose.msra.mxu0 0.0
    %1025 = vmatpush.xpose.msra.mxu0 0.0
    %1026 = vmatpush.xpose.msra.mxu0 0.0
    %1027 = vmatpush.xpose.msra.mxu0 %v160
    %1028 = vmatmul.f32.gmra.mxu0 %v387
    %v1029 = vpop.f32.mrf.mxu0
    %v1030 = vadd.f32 %v1010, %v1029
    %1031 = vdwg.mxu0
    %1032 = vmatpush.xpose.msra.mxu0 0.0
    %1033 = vmatpush.xpose.msra.mxu0 0.0
    %1034 = vmatpush.xpose.msra.mxu0 0.0
    %1035 = vmatpush.xpose.msra.mxu0 0.0
    %1036 = vmatpush.xpose.msra.mxu0 0.0
    %1037 = vmatpush.xpose.msra.mxu0 0.0
    %1038 = vmatpush.xpose.msra.mxu0 0.0
    %1039 = vmatpush.xpose.msra.mxu0 0.0
    %1040 = vmatpush.xpose.msra.mxu0 0.0
    %1041 = vmatpush.xpose.msra.mxu0 0.0
    %1042 = vmatpush.xpose.msra.mxu0 0.0
    %1043 = vmatpush.xpose.msra.mxu0 0.0
    %1044 = vmatpush.xpose.msra.mxu0 0.0
    %1045 = vmatpush.xpose.msra.mxu0 0.0
    %1046 = vmatpush.xpose.msra.mxu0 0.0
    %1047 = vmatpush.xpose.msra.mxu0 %v161
    %1048 = vmatmul.f32.gmra.mxu0 %v388
    %v1049 = vpop.f32.mrf.mxu0
    %v1050 = vadd.f32 %v1030, %v1049
    %1051 = vdwg.mxu0
    %1052 = vmatpush.xpose.msra.mxu0 0.0
    %1053 = vmatpush.xpose.msra.mxu0 0.0
    %1054 = vmatpush.xpose.msra.mxu0 0.0
    %1055 = vmatpush.xpose.msra.mxu0 0.0
    %1056 = vmatpush.xpose.msra.mxu0 0.0
    %1057 = vmatpush.xpose.msra.mxu0 0.0
    %1058 = vmatpush.xpose.msra.mxu0 0.0
    %1059 = vmatpush.xpose.msra.mxu0 0.0
    %1060 = vmatpush.xpose.msra.mxu0 0.0
    %1061 = vmatpush.xpose.msra.mxu0 0.0
    %1062 = vmatpush.xpose.msra.mxu0 0.0
    %1063 = vmatpush.xpose.msra.mxu0 0.0
    %1064 = vmatpush.xpose.msra.mxu0 0.0
    %1065 = vmatpush.xpose.msra.mxu0 0.0
    %1066 = vmatpush.xpose.msra.mxu0 0.0
    %1067 = vmatpush.xpose.msra.mxu0 %v162
    %1068 = vmatmul.f32.gmra.mxu0 %v389
    %v1069 = vpop.f32.mrf.mxu0
    %v1070 = vadd.f32 %v1050, %v1069
    %1071 = vdwg.mxu0
    %1072 = vmatpush.xpose.msra.mxu0 0.0
    %1073 = vmatpush.xpose.msra.mxu0 0.0
    %1074 = vmatpush.xpose.msra.mxu0 0.0
    %1075 = vmatpush.xpose.msra.mxu0 0.0
    %1076 = vmatpush.xpose.msra.mxu0 0.0
    %1077 = vmatpush.xpose.msra.mxu0 0.0
    %1078 = vmatpush.xpose.msra.mxu0 0.0
    %1079 = vmatpush.xpose.msra.mxu0 0.0
    %1080 = vmatpush.xpose.msra.mxu0 0.0
    %1081 = vmatpush.xpose.msra.mxu0 0.0
    %1082 = vmatpush.xpose.msra.mxu0 0.0
    %1083 = vmatpush.xpose.msra.mxu0 0.0
    %1084 = vmatpush.xpose.msra.mxu0 0.0
    %1085 = vmatpush.xpose.msra.mxu0 0.0
    %1086 = vmatpush.xpose.msra.mxu0 0.0
    %1087 = vmatpush.xpose.msra.mxu0 %v163
    %1088 = vmatmul.f32.gmra.mxu0 %v390
    %v1089 = vpop.f32.mrf.mxu0
    %v1090 = vadd.f32 %v1070, %v1089
    %1091 = vdwg.mxu0
    %1092 = vmatpush.xpose.msra.mxu0 0.0
    %1093 = vmatpush.xpose.msra.mxu0 0.0
    %1094 = vmatpush.xpose.msra.mxu0 0.0
    %1095 = vmatpush.xpose.msra.mxu0 0.0
    %1096 = vmatpush.xpose.msra.mxu0 0.0
    %1097 = vmatpush.xpose.msra.mxu0 0.0
    %1098 = vmatpush.xpose.msra.mxu0 0.0
    %1099 = vmatpush.xpose.msra.mxu0 0.0
    %1100 = vmatpush.xpose.msra.mxu0 0.0
    %1101 = vmatpush.xpose.msra.mxu0 0.0
    %1102 = vmatpush.xpose.msra.mxu0 0.0
    %1103 = vmatpush.xpose.msra.mxu0 0.0
    %1104 = vmatpush.xpose.msra.mxu0 0.0
    %1105 = vmatpush.xpose.msra.mxu0 0.0
    %1106 = vmatpush.xpose.msra.mxu0 0.0
    %1107 = vmatpush.xpose.msra.mxu0 %v164
    %1108 = vmatmul.f32.gmra.mxu0 %v391
    %v1109 = vpop.f32.mrf.mxu0
    %v1110 = vadd.f32 %v1090, %v1109
    %1111 = vdwg.mxu0
    %1112 = vmatpush.xpose.msra.mxu0 0.0
    %1113 = vmatpush.xpose.msra.mxu0 0.0
    %1114 = vmatpush.xpose.msra.mxu0 0.0
    %1115 = vmatpush.xpose.msra.mxu0 0.0
    %1116 = vmatpush.xpose.msra.mxu0 0.0
    %1117 = vmatpush.xpose.msra.mxu0 0.0
    %1118 = vmatpush.xpose.msra.mxu0 0.0
    %1119 = vmatpush.xpose.msra.mxu0 0.0
    %1120 = vmatpush.xpose.msra.mxu0 0.0
    %1121 = vmatpush.xpose.msra.mxu0 0.0
    %1122 = vmatpush.xpose.msra.mxu0 0.0
    %1123 = vmatpush.xpose.msra.mxu0 0.0
    %1124 = vmatpush.xpose.msra.mxu0 0.0
    %1125 = vmatpush.xpose.msra.mxu0 0.0
    %1126 = vmatpush.xpose.msra.mxu0 0.0
    %1127 = vmatpush.xpose.msra.mxu0 %v165
    %1128 = vmatmul.f32.gmra.mxu0 %v400
    %v1129 = vpop.f32.mrf.mxu0
    %v1130 = vadd.f32 %v1110, %v1129
    %1131 = vdwg.mxu0
    %1132 = vmatpush.xpose.msra.mxu0 0.0
    %1133 = vmatpush.xpose.msra.mxu0 0.0
    %1134 = vmatpush.xpose.msra.mxu0 0.0
    %1135 = vmatpush.xpose.msra.mxu0 0.0
    %1136 = vmatpush.xpose.msra.mxu0 0.0
    %1137 = vmatpush.xpose.msra.mxu0 0.0
    %1138 = vmatpush.xpose.msra.mxu0 0.0
    %1139 = vmatpush.xpose.msra.mxu0 0.0
    %1140 = vmatpush.xpose.msra.mxu0 0.0
    %1141 = vmatpush.xpose.msra.mxu0 0.0
    %1142 = vmatpush.xpose.msra.mxu0 0.0
    %1143 = vmatpush.xpose.msra.mxu0 0.0
    %1144 = vmatpush.xpose.msra.mxu0 0.0
    %1145 = vmatpush.xpose.msra.mxu0 0.0
    %1146 = vmatpush.xpose.msra.mxu0 0.0
    %1147 = vmatpush.xpose.msra.mxu0 %v166
    %1148 = vmatmul.f32.gmra.mxu0 %v401
    %v1149 = vpop.f32.mrf.mxu0
    %v1150 = vadd.f32 %v1130, %v1149
    %1151 = vdwg.mxu0
    %1152 = vmatpush.xpose.msra.mxu0 0.0
    %1153 = vmatpush.xpose.msra.mxu0 0.0
    %1154 = vmatpush.xpose.msra.mxu0 0.0
    %1155 = vmatpush.xpose.msra.mxu0 0.0
    %1156 = vmatpush.xpose.msra.mxu0 0.0
    %1157 = vmatpush.xpose.msra.mxu0 0.0
    %1158 = vmatpush.xpose.msra.mxu0 0.0
    %1159 = vmatpush.xpose.msra.mxu0 0.0
    %1160 = vmatpush.xpose.msra.mxu0 0.0
    %1161 = vmatpush.xpose.msra.mxu0 0.0
    %1162 = vmatpush.xpose.msra.mxu0 0.0
    %1163 = vmatpush.xpose.msra.mxu0 0.0
    %1164 = vmatpush.xpose.msra.mxu0 0.0
    %1165 = vmatpush.xpose.msra.mxu0 0.0
    %1166 = vmatpush.xpose.msra.mxu0 0.0
    %1167 = vmatpush.xpose.msra.mxu0 %v167
    %1168 = vmatmul.f32.gmra.mxu0 %v402
    %v1169 = vpop.f32.mrf.mxu0
    %v1170 = vadd.f32 %v1150, %v1169
    %1171 = vdwg.mxu0
    %1172 = vmatpush.xpose.msra.mxu0 0.0
    %1173 = vmatpush.xpose.msra.mxu0 0.0
    %1174 = vmatpush.xpose.msra.mxu0 0.0
    %1175 = vmatpush.xpose.msra.mxu0 0.0
    %1176 = vmatpush.xpose.msra.mxu0 0.0
    %1177 = vmatpush.xpose.msra.mxu0 0.0
    %1178 = vmatpush.xpose.msra.mxu0 0.0
    %1179 = vmatpush.xpose.msra.mxu0 0.0
    %1180 = vmatpush.xpose.msra.mxu0 0.0
    %1181 = vmatpush.xpose.msra.mxu0 0.0
    %1182 = vmatpush.xpose.msra.mxu0 0.0
    %1183 = vmatpush.xpose.msra.mxu0 0.0
    %1184 = vmatpush.xpose.msra.mxu0 0.0
    %1185 = vmatpush.xpose.msra.mxu0 0.0
    %1186 = vmatpush.xpose.msra.mxu0 0.0
    %1187 = vmatpush.xpose.msra.mxu0 %v168
    %1188 = vmatmul.f32.gmra.mxu0 %v403
    %v1189 = vpop.f32.mrf.mxu0
    %v1190 = vadd.f32 %v1170, %v1189
    %1191 = vdwg.mxu0
    %1192 = vmatpush.xpose.msra.mxu0 0.0
    %1193 = vmatpush.xpose.msra.mxu0 0.0
    %1194 = vmatpush.xpose.msra.mxu0 0.0
    %1195 = vmatpush.xpose.msra.mxu0 0.0
    %1196 = vmatpush.xpose.msra.mxu0 0.0
    %1197 = vmatpush.xpose.msra.mxu0 0.0
    %1198 = vmatpush.xpose.msra.mxu0 0.0
    %1199 = vmatpush.xpose.msra.mxu0 0.0
    %1200 = vmatpush.xpose.msra.mxu0 0.0
    %1201 = vmatpush.xpose.msra.mxu0 0.0
    %1202 = vmatpush.xpose.msra.mxu0 0.0
    %1203 = vmatpush.xpose.msra.mxu0 0.0
    %1204 = vmatpush.xpose.msra.mxu0 0.0
    %1205 = vmatpush.xpose.msra.mxu0 0.0
    %1206 = vmatpush.xpose.msra.mxu0 0.0
    %1207 = vmatpush.xpose.msra.mxu0 %v169
    %1208 = vmatmul.f32.gmra.mxu0 %v404
    %v1209 = vpop.f32.mrf.mxu0
    %v1210 = vadd.f32 %v1190, %v1209
    %1211 = vdwg.mxu0
    %1212 = vmatpush.xpose.msra.mxu0 0.0
    %1213 = vmatpush.xpose.msra.mxu0 0.0
    %1214 = vmatpush.xpose.msra.mxu0 0.0
    %1215 = vmatpush.xpose.msra.mxu0 0.0
    %1216 = vmatpush.xpose.msra.mxu0 0.0
    %1217 = vmatpush.xpose.msra.mxu0 0.0
    %1218 = vmatpush.xpose.msra.mxu0 0.0
    %1219 = vmatpush.xpose.msra.mxu0 0.0
    %1220 = vmatpush.xpose.msra.mxu0 0.0
    %1221 = vmatpush.xpose.msra.mxu0 0.0
    %1222 = vmatpush.xpose.msra.mxu0 0.0
    %1223 = vmatpush.xpose.msra.mxu0 0.0
    %1224 = vmatpush.xpose.msra.mxu0 0.0
    %1225 = vmatpush.xpose.msra.mxu0 0.0
    %1226 = vmatpush.xpose.msra.mxu0 0.0
    %1227 = vmatpush.xpose.msra.mxu0 %v170
    %1228 = vmatmul.f32.gmra.mxu0 %v405
    %v1229 = vpop.f32.mrf.mxu0
    %v1230 = vadd.f32 %v1210, %v1229
    %1231 = vdwg.mxu0
    %1232 = vmatpush.xpose.msra.mxu0 0.0
    %1233 = vmatpush.xpose.msra.mxu0 0.0
    %1234 = vmatpush.xpose.msra.mxu0 0.0
    %1235 = vmatpush.xpose.msra.mxu0 0.0
    %1236 = vmatpush.xpose.msra.mxu0 0.0
    %1237 = vmatpush.xpose.msra.mxu0 0.0
    %1238 = vmatpush.xpose.msra.mxu0 0.0
    %1239 = vmatpush.xpose.msra.mxu0 0.0
    %1240 = vmatpush.xpose.msra.mxu0 0.0
    %1241 = vmatpush.xpose.msra.mxu0 0.0
    %1242 = vmatpush.xpose.msra.mxu0 0.0
    %1243 = vmatpush.xpose.msra.mxu0 0.0
    %1244 = vmatpush.xpose.msra.mxu0 0.0
    %1245 = vmatpush.xpose.msra.mxu0 0.0
    %1246 = vmatpush.xpose.msra.mxu0 0.0
    %1247 = vmatpush.xpose.msra.mxu0 %v171
    %1248 = vmatmul.f32.gmra.mxu0 %v406
    %v1249 = vpop.f32.mrf.mxu0
    %v1250 = vadd.f32 %v1230, %v1249
    %1251 = vdwg.mxu0
    %1252 = vmatpush.xpose.msra.mxu0 0.0
    %1253 = vmatpush.xpose.msra.mxu0 0.0
    %1254 = vmatpush.xpose.msra.mxu0 0.0
    %1255 = vmatpush.xpose.msra.mxu0 0.0
    %1256 = vmatpush.xpose.msra.mxu0 0.0
    %1257 = vmatpush.xpose.msra.mxu0 0.0
    %1258 = vmatpush.xpose.msra.mxu0 0.0
    %1259 = vmatpush.xpose.msra.mxu0 0.0
    %1260 = vmatpush.xpose.msra.mxu0 0.0
    %1261 = vmatpush.xpose.msra.mxu0 0.0
    %1262 = vmatpush.xpose.msra.mxu0 0.0
    %1263 = vmatpush.xpose.msra.mxu0 0.0
    %1264 = vmatpush.xpose.msra.mxu0 0.0
    %1265 = vmatpush.xpose.msra.mxu0 0.0
    %1266 = vmatpush.xpose.msra.mxu0 0.0
    %1267 = vmatpush.xpose.msra.mxu0 %v172
    %1268 = vmatmul.f32.gmra.mxu0 %v407
    %v1269 = vpop.f32.mrf.mxu0
    %v1270 = vadd.f32 %v1250, %v1269
    %1271 = vdwg.mxu0
    %1272 = vmatpush.xpose.msra.mxu0 0.0
    %1273 = vmatpush.xpose.msra.mxu0 0.0
    %1274 = vmatpush.xpose.msra.mxu0 0.0
    %1275 = vmatpush.xpose.msra.mxu0 0.0
    %1276 = vmatpush.xpose.msra.mxu0 0.0
    %1277 = vmatpush.xpose.msra.mxu0 0.0
    %1278 = vmatpush.xpose.msra.mxu0 0.0
    %1279 = vmatpush.xpose.msra.mxu0 0.0
    %1280 = vmatpush.xpose.msra.mxu0 0.0
    %1281 = vmatpush.xpose.msra.mxu0 0.0
    %1282 = vmatpush.xpose.msra.mxu0 0.0
    %1283 = vmatpush.xpose.msra.mxu0 0.0
    %1284 = vmatpush.xpose.msra.mxu0 0.0
    %1285 = vmatpush.xpose.msra.mxu0 0.0
    %1286 = vmatpush.xpose.msra.mxu0 0.0
    %1287 = vmatpush.xpose.msra.mxu0 %v173
    %1288 = vmatmul.f32.gmra.mxu0 %v416
    %v1289 = vpop.f32.mrf.mxu0
    %v1290 = vadd.f32 %v1270, %v1289
    %1291 = vdwg.mxu0
    %1292 = vmatpush.xpose.msra.mxu0 0.0
    %1293 = vmatpush.xpose.msra.mxu0 0.0
    %1294 = vmatpush.xpose.msra.mxu0 0.0
    %1295 = vmatpush.xpose.msra.mxu0 0.0
    %1296 = vmatpush.xpose.msra.mxu0 0.0
    %1297 = vmatpush.xpose.msra.mxu0 0.0
    %1298 = vmatpush.xpose.msra.mxu0 0.0
    %1299 = vmatpush.xpose.msra.mxu0 0.0
    %1300 = vmatpush.xpose.msra.mxu0 0.0
    %1301 = vmatpush.xpose.msra.mxu0 0.0
    %1302 = vmatpush.xpose.msra.mxu0 0.0
    %1303 = vmatpush.xpose.msra.mxu0 0.0
    %1304 = vmatpush.xpose.msra.mxu0 0.0
    %1305 = vmatpush.xpose.msra.mxu0 0.0
    %1306 = vmatpush.xpose.msra.mxu0 0.0
    %1307 = vmatpush.xpose.msra.mxu0 %v174
    %1308 = vmatmul.f32.gmra.mxu0 %v417
    %v1309 = vpop.f32.mrf.mxu0
    %v1310 = vadd.f32 %v1290, %v1309
    %1311 = vdwg.mxu0
    %1312 = vmatpush.xpose.msra.mxu0 0.0
    %1313 = vmatpush.xpose.msra.mxu0 0.0
    %1314 = vmatpush.xpose.msra.mxu0 0.0
    %1315 = vmatpush.xpose.msra.mxu0 0.0
    %1316 = vmatpush.xpose.msra.mxu0 0.0
    %1317 = vmatpush.xpose.msra.mxu0 0.0
    %1318 = vmatpush.xpose.msra.mxu0 0.0
    %1319 = vmatpush.xpose.msra.mxu0 0.0
    %1320 = vmatpush.xpose.msra.mxu0 0.0
    %1321 = vmatpush.xpose.msra.mxu0 0.0
    %1322 = vmatpush.xpose.msra.mxu0 0.0
    %1323 = vmatpush.xpose.msra.mxu0 0.0
    %1324 = vmatpush.xpose.msra.mxu0 0.0
    %1325 = vmatpush.xpose.msra.mxu0 0.0
    %1326 = vmatpush.xpose.msra.mxu0 0.0
    %1327 = vmatpush.xpose.msra.mxu0 %v175
    %1328 = vmatmul.f32.gmra.mxu0 %v418
    %v1329 = vpop.f32.mrf.mxu0
    %v1330 = vadd.f32 %v1310, %v1329
    %1331 = vdwg.mxu0
    %1332 = vmatpush.xpose.msra.mxu0 0.0
    %1333 = vmatpush.xpose.msra.mxu0 0.0
    %1334 = vmatpush.xpose.msra.mxu0 0.0
    %1335 = vmatpush.xpose.msra.mxu0 0.0
    %1336 = vmatpush.xpose.msra.mxu0 0.0
    %1337 = vmatpush.xpose.msra.mxu0 0.0
    %1338 = vmatpush.xpose.msra.mxu0 0.0
    %1339 = vmatpush.xpose.msra.mxu0 0.0
    %1340 = vmatpush.xpose.msra.mxu0 0.0
    %1341 = vmatpush.xpose.msra.mxu0 0.0
    %1342 = vmatpush.xpose.msra.mxu0 0.0
    %1343 = vmatpush.xpose.msra.mxu0 0.0
    %1344 = vmatpush.xpose.msra.mxu0 0.0
    %1345 = vmatpush.xpose.msra.mxu0 0.0
    %1346 = vmatpush.xpose.msra.mxu0 0.0
    %1347 = vmatpush.xpose.msra.mxu0 %v176
    %1348 = vmatmul.f32.gmra.mxu0 %v419
    %v1349 = vpop.f32.mrf.mxu0
    %v1350 = vadd.f32 %v1330, %v1349
    %1351 = vdwg.mxu0
    %1352 = vmatpush.xpose.msra.mxu0 0.0
    %1353 = vmatpush.xpose.msra.mxu0 0.0
    %1354 = vmatpush.xpose.msra.mxu0 0.0
    %1355 = vmatpush.xpose.msra.mxu0 0.0
    %1356 = vmatpush.xpose.msra.mxu0 0.0
    %1357 = vmatpush.xpose.msra.mxu0 0.0
    %1358 = vmatpush.xpose.msra.mxu0 0.0
    %1359 = vmatpush.xpose.msra.mxu0 0.0
    %1360 = vmatpush.xpose.msra.mxu0 0.0
    %1361 = vmatpush.xpose.msra.mxu0 0.0
    %1362 = vmatpush.xpose.msra.mxu0 0.0
    %1363 = vmatpush.xpose.msra.mxu0 0.0
    %1364 = vmatpush.xpose.msra.mxu0 0.0
    %1365 = vmatpush.xpose.msra.mxu0 0.0
    %1366 = vmatpush.xpose.msra.mxu0 0.0
    %1367 = vmatpush.xpose.msra.mxu0 %v177
    %1368 = vmatmul.f32.gmra.mxu0 %v420
    %v1369 = vpop.f32.mrf.mxu0
    %v1370 = vadd.f32 %v1350, %v1369
    %1371 = vdwg.mxu0
    %1372 = vmatpush.xpose.msra.mxu0 0.0
    %1373 = vmatpush.xpose.msra.mxu0 0.0
    %1374 = vmatpush.xpose.msra.mxu0 0.0
    %1375 = vmatpush.xpose.msra.mxu0 0.0
    %1376 = vmatpush.xpose.msra.mxu0 0.0
    %1377 = vmatpush.xpose.msra.mxu0 0.0
    %1378 = vmatpush.xpose.msra.mxu0 0.0
    %1379 = vmatpush.xpose.msra.mxu0 0.0
    %1380 = vmatpush.xpose.msra.mxu0 0.0
    %1381 = vmatpush.xpose.msra.mxu0 0.0
    %1382 = vmatpush.xpose.msra.mxu0 0.0
    %1383 = vmatpush.xpose.msra.mxu0 0.0
    %1384 = vmatpush.xpose.msra.mxu0 0.0
    %1385 = vmatpush.xpose.msra.mxu0 0.0
    %1386 = vmatpush.xpose.msra.mxu0 0.0
    %1387 = vmatpush.xpose.msra.mxu0 %v178
    %1388 = vmatmul.f32.gmra.mxu0 %v421
    %v1389 = vpop.f32.mrf.mxu0
    %v1390 = vadd.f32 %v1370, %v1389
    %1391 = vdwg.mxu0
    %1392 = vmatpush.xpose.msra.mxu0 0.0
    %1393 = vmatpush.xpose.msra.mxu0 0.0
    %1394 = vmatpush.xpose.msra.mxu0 0.0
    %1395 = vmatpush.xpose.msra.mxu0 0.0
    %1396 = vmatpush.xpose.msra.mxu0 0.0
    %1397 = vmatpush.xpose.msra.mxu0 0.0
    %1398 = vmatpush.xpose.msra.mxu0 0.0
    %1399 = vmatpush.xpose.msra.mxu0 0.0
    %1400 = vmatpush.xpose.msra.mxu0 0.0
    %1401 = vmatpush.xpose.msra.mxu0 0.0
    %1402 = vmatpush.xpose.msra.mxu0 0.0
    %1403 = vmatpush.xpose.msra.mxu0 0.0
    %1404 = vmatpush.xpose.msra.mxu0 0.0
    %1405 = vmatpush.xpose.msra.mxu0 0.0
    %1406 = vmatpush.xpose.msra.mxu0 0.0
    %1407 = vmatpush.xpose.msra.mxu0 %v179
    %1408 = vmatmul.f32.gmra.mxu0 %v422
    %v1409 = vpop.f32.mrf.mxu0
    %v1410 = vadd.f32 %v1390, %v1409
    %1411 = vdwg.mxu0
    %1412 = vmatpush.xpose.msra.mxu0 0.0
    %1413 = vmatpush.xpose.msra.mxu0 0.0
    %1414 = vmatpush.xpose.msra.mxu0 0.0
    %1415 = vmatpush.xpose.msra.mxu0 0.0
    %1416 = vmatpush.xpose.msra.mxu0 0.0
    %1417 = vmatpush.xpose.msra.mxu0 0.0
    %1418 = vmatpush.xpose.msra.mxu0 0.0
    %1419 = vmatpush.xpose.msra.mxu0 0.0
    %1420 = vmatpush.xpose.msra.mxu0 0.0
    %1421 = vmatpush.xpose.msra.mxu0 0.0
    %1422 = vmatpush.xpose.msra.mxu0 0.0
    %1423 = vmatpush.xpose.msra.mxu0 0.0
    %1424 = vmatpush.xpose.msra.mxu0 0.0
    %1425 = vmatpush.xpose.msra.mxu0 0.0
    %1426 = vmatpush.xpose.msra.mxu0 0.0
    %1427 = vmatpush.xpose.msra.mxu0 %v180
    %1428 = vmatmul.f32.gmra.mxu0 %v423
    %v1429 = vpop.f32.mrf.mxu0
    %v1430 = vadd.f32 %v1410, %v1429
    %1431 = vdwg.mxu0
    %1432 = vmatpush.xpose.msra.mxu0 0.0
    %1433 = vmatpush.xpose.msra.mxu0 0.0
    %1434 = vmatpush.xpose.msra.mxu0 0.0
    %1435 = vmatpush.xpose.msra.mxu0 0.0
    %1436 = vmatpush.xpose.msra.mxu0 0.0
    %1437 = vmatpush.xpose.msra.mxu0 0.0
    %1438 = vmatpush.xpose.msra.mxu0 0.0
    %1439 = vmatpush.xpose.msra.mxu0 0.0
    %1440 = vmatpush.xpose.msra.mxu0 0.0
    %1441 = vmatpush.xpose.msra.mxu0 0.0
    %1442 = vmatpush.xpose.msra.mxu0 0.0
    %1443 = vmatpush.xpose.msra.mxu0 0.0
    %1444 = vmatpush.xpose.msra.mxu0 0.0
    %1445 = vmatpush.xpose.msra.mxu0 0.0
    %1446 = vmatpush.xpose.msra.mxu0 0.0
    %1447 = vmatpush.xpose.msra.mxu0 %v181
    %1448 = vmatmul.f32.gmra.mxu0 %v432
    %v1449 = vpop.f32.mrf.mxu0
    %v1450 = vadd.f32 %v1430, %v1449
    %1451 = vdwg.mxu0
    %1452 = vmatpush.xpose.msra.mxu0 0.0
    %1453 = vmatpush.xpose.msra.mxu0 0.0
    %1454 = vmatpush.xpose.msra.mxu0 0.0
    %1455 = vmatpush.xpose.msra.mxu0 0.0
    %1456 = vmatpush.xpose.msra.mxu0 0.0
    %1457 = vmatpush.xpose.msra.mxu0 0.0
    %1458 = vmatpush.xpose.msra.mxu0 0.0
    %1459 = vmatpush.xpose.msra.mxu0 0.0
    %1460 = vmatpush.xpose.msra.mxu0 0.0
    %1461 = vmatpush.xpose.msra.mxu0 0.0
    %1462 = vmatpush.xpose.msra.mxu0 0.0
    %1463 = vmatpush.xpose.msra.mxu0 0.0
    %1464 = vmatpush.xpose.msra.mxu0 0.0
    %1465 = vmatpush.xpose.msra.mxu0 0.0
    %1466 = vmatpush.xpose.msra.mxu0 0.0
    %1467 = vmatpush.xpose.msra.mxu0 %v182
    %1468 = vmatmul.f32.gmra.mxu0 %v433
    %v1469 = vpop.f32.mrf.mxu0
    %v1470 = vadd.f32 %v1450, %v1469
    %1471 = vdwg.mxu0
    %1472 = vmatpush.xpose.msra.mxu0 0.0
    %1473 = vmatpush.xpose.msra.mxu0 0.0
    %1474 = vmatpush.xpose.msra.mxu0 0.0
    %1475 = vmatpush.xpose.msra.mxu0 0.0
    %1476 = vmatpush.xpose.msra.mxu0 0.0
    %1477 = vmatpush.xpose.msra.mxu0 0.0
    %1478 = vmatpush.xpose.msra.mxu0 0.0
    %1479 = vmatpush.xpose.msra.mxu0 0.0
    %1480 = vmatpush.xpose.msra.mxu0 0.0
    %1481 = vmatpush.xpose.msra.mxu0 0.0
    %1482 = vmatpush.xpose.msra.mxu0 0.0
    %1483 = vmatpush.xpose.msra.mxu0 0.0
    %1484 = vmatpush.xpose.msra.mxu0 0.0
    %1485 = vmatpush.xpose.msra.mxu0 0.0
    %1486 = vmatpush.xpose.msra.mxu0 0.0
    %1487 = vmatpush.xpose.msra.mxu0 %v183
    %1488 = vmatmul.f32.gmra.mxu0 %v434
    %v1489 = vpop.f32.mrf.mxu0
    %v1490 = vadd.f32 %v1470, %v1489
    %1491 = vdwg.mxu0
    %1492 = vmatpush.xpose.msra.mxu0 0.0
    %1493 = vmatpush.xpose.msra.mxu0 0.0
    %1494 = vmatpush.xpose.msra.mxu0 0.0
    %1495 = vmatpush.xpose.msra.mxu0 0.0
    %1496 = vmatpush.xpose.msra.mxu0 0.0
    %1497 = vmatpush.xpose.msra.mxu0 0.0
    %1498 = vmatpush.xpose.msra.mxu0 0.0
    %1499 = vmatpush.xpose.msra.mxu0 0.0
    %1500 = vmatpush.xpose.msra.mxu0 0.0
    %1501 = vmatpush.xpose.msra.mxu0 0.0
    %1502 = vmatpush.xpose.msra.mxu0 0.0
    %1503 = vmatpush.xpose.msra.mxu0 0.0
    %1504 = vmatpush.xpose.msra.mxu0 0.0
    %1505 = vmatpush.xpose.msra.mxu0 0.0
    %1506 = vmatpush.xpose.msra.mxu0 0.0
    %1507 = vmatpush.xpose.msra.mxu0 %v184
    %1508 = vmatmul.f32.gmra.mxu0 %v435
    %v1509 = vpop.f32.mrf.mxu0
    %v1510 = vadd.f32 %v1490, %v1509
    %1511 = vdwg.mxu0
    %1512 = vmatpush.xpose.msra.mxu0 0.0
    %1513 = vmatpush.xpose.msra.mxu0 0.0
    %1514 = vmatpush.xpose.msra.mxu0 0.0
    %1515 = vmatpush.xpose.msra.mxu0 0.0
    %1516 = vmatpush.xpose.msra.mxu0 0.0
    %1517 = vmatpush.xpose.msra.mxu0 0.0
    %1518 = vmatpush.xpose.msra.mxu0 0.0
    %1519 = vmatpush.xpose.msra.mxu0 0.0
    %1520 = vmatpush.xpose.msra.mxu0 0.0
    %1521 = vmatpush.xpose.msra.mxu0 0.0
    %1522 = vmatpush.xpose.msra.mxu0 0.0
    %1523 = vmatpush.xpose.msra.mxu0 0.0
    %1524 = vmatpush.xpose.msra.mxu0 0.0
    %1525 = vmatpush.xpose.msra.mxu0 0.0
    %1526 = vmatpush.xpose.msra.mxu0 0.0
    %1527 = vmatpush.xpose.msra.mxu0 %v185
    %1528 = vmatmul.f32.gmra.mxu0 %v436
    %v1529 = vpop.f32.mrf.mxu0
    %v1530 = vadd.f32 %v1510, %v1529
    %1531 = vdwg.mxu0
    %1532 = vmatpush.xpose.msra.mxu0 0.0
    %1533 = vmatpush.xpose.msra.mxu0 0.0
    %1534 = vmatpush.xpose.msra.mxu0 0.0
    %1535 = vmatpush.xpose.msra.mxu0 0.0
    %1536 = vmatpush.xpose.msra.mxu0 0.0
    %1537 = vmatpush.xpose.msra.mxu0 0.0
    %1538 = vmatpush.xpose.msra.mxu0 0.0
    %1539 = vmatpush.xpose.msra.mxu0 0.0
    %1540 = vmatpush.xpose.msra.mxu0 0.0
    %1541 = vmatpush.xpose.msra.mxu0 0.0
    %1542 = vmatpush.xpose.msra.mxu0 0.0
    %1543 = vmatpush.xpose.msra.mxu0 0.0
    %1544 = vmatpush.xpose.msra.mxu0 0.0
    %1545 = vmatpush.xpose.msra.mxu0 0.0
    %1546 = vmatpush.xpose.msra.mxu0 0.0
    %1547 = vmatpush.xpose.msra.mxu0 %v186
    %1548 = vmatmul.f32.gmra.mxu0 %v437
    %v1549 = vpop.f32.mrf.mxu0
    %v1550 = vadd.f32 %v1530, %v1549
    %1551 = vdwg.mxu0
    %1552 = vmatpush.xpose.msra.mxu0 0.0
    %1553 = vmatpush.xpose.msra.mxu0 0.0
    %1554 = vmatpush.xpose.msra.mxu0 0.0
    %1555 = vmatpush.xpose.msra.mxu0 0.0
    %1556 = vmatpush.xpose.msra.mxu0 0.0
    %1557 = vmatpush.xpose.msra.mxu0 0.0
    %1558 = vmatpush.xpose.msra.mxu0 0.0
    %1559 = vmatpush.xpose.msra.mxu0 0.0
    %1560 = vmatpush.xpose.msra.mxu0 0.0
    %1561 = vmatpush.xpose.msra.mxu0 0.0
    %1562 = vmatpush.xpose.msra.mxu0 0.0
    %1563 = vmatpush.xpose.msra.mxu0 0.0
    %1564 = vmatpush.xpose.msra.mxu0 0.0
    %1565 = vmatpush.xpose.msra.mxu0 0.0
    %1566 = vmatpush.xpose.msra.mxu0 0.0
    %1567 = vmatpush.xpose.msra.mxu0 %v187
    %1568 = vmatmul.f32.gmra.mxu0 %v438
    %v1569 = vpop.f32.mrf.mxu0
    %v1570 = vadd.f32 %v1550, %v1569
    %1571 = vdwg.mxu0
    %1572 = vmatpush.xpose.msra.mxu0 0.0
    %1573 = vmatpush.xpose.msra.mxu0 0.0
    %1574 = vmatpush.xpose.msra.mxu0 0.0
    %1575 = vmatpush.xpose.msra.mxu0 0.0
    %1576 = vmatpush.xpose.msra.mxu0 0.0
    %1577 = vmatpush.xpose.msra.mxu0 0.0
    %1578 = vmatpush.xpose.msra.mxu0 0.0
    %1579 = vmatpush.xpose.msra.mxu0 0.0
    %1580 = vmatpush.xpose.msra.mxu0 0.0
    %1581 = vmatpush.xpose.msra.mxu0 0.0
    %1582 = vmatpush.xpose.msra.mxu0 0.0
    %1583 = vmatpush.xpose.msra.mxu0 0.0
    %1584 = vmatpush.xpose.msra.mxu0 0.0
    %1585 = vmatpush.xpose.msra.mxu0 0.0
    %1586 = vmatpush.xpose.msra.mxu0 0.0
    %1587 = vmatpush.xpose.msra.mxu0 %v188
    %1588 = vmatmul.f32.gmra.mxu0 %v439
    %v1589 = vpop.f32.mrf.mxu0
    %v1590 = vadd.f32 %v1570, %v1589
    %1591 = vdwg.mxu0
    %1592 = vmatpush.xpose.msra.mxu0 0.0
    %1593 = vmatpush.xpose.msra.mxu0 0.0
    %1594 = vmatpush.xpose.msra.mxu0 0.0
    %1595 = vmatpush.xpose.msra.mxu0 0.0
    %1596 = vmatpush.xpose.msra.mxu0 0.0
    %1597 = vmatpush.xpose.msra.mxu0 0.0
    %1598 = vmatpush.xpose.msra.mxu0 0.0
    %1599 = vmatpush.xpose.msra.mxu0 0.0
    %1600 = vmatpush.xpose.msra.mxu0 0.0
    %1601 = vmatpush.xpose.msra.mxu0 0.0
    %1602 = vmatpush.xpose.msra.mxu0 0.0
    %1603 = vmatpush.xpose.msra.mxu0 0.0
    %1604 = vmatpush.xpose.msra.mxu0 0.0
    %1605 = vmatpush.xpose.msra.mxu0 0.0
    %1606 = vmatpush.xpose.msra.mxu0 0.0
    %1607 = vmatpush.xpose.msra.mxu0 %v189
    %1608 = vmatmul.f32.gmra.mxu0 %v448
    %v1609 = vpop.f32.mrf.mxu0
    %v1610 = vadd.f32 %v1590, %v1609
    %1611 = vdwg.mxu0
    %1612 = vmatpush.xpose.msra.mxu0 0.0
    %1613 = vmatpush.xpose.msra.mxu0 0.0
    %1614 = vmatpush.xpose.msra.mxu0 0.0
    %1615 = vmatpush.xpose.msra.mxu0 0.0
    %1616 = vmatpush.xpose.msra.mxu0 0.0
    %1617 = vmatpush.xpose.msra.mxu0 0.0
    %1618 = vmatpush.xpose.msra.mxu0 0.0
    %1619 = vmatpush.xpose.msra.mxu0 0.0
    %1620 = vmatpush.xpose.msra.mxu0 0.0
    %1621 = vmatpush.xpose.msra.mxu0 0.0
    %1622 = vmatpush.xpose.msra.mxu0 0.0
    %1623 = vmatpush.xpose.msra.mxu0 0.0
    %1624 = vmatpush.xpose.msra.mxu0 0.0
    %1625 = vmatpush.xpose.msra.mxu0 0.0
    %1626 = vmatpush.xpose.msra.mxu0 0.0
    %1627 = vmatpush.xpose.msra.mxu0 %v190
    %1628 = vmatmul.f32.gmra.mxu0 %v449
    %v1629 = vpop.f32.mrf.mxu0
    %v1630 = vadd.f32 %v1610, %v1629
    %1631 = vdwg.mxu0
    %1632 = vmatpush.xpose.msra.mxu0 0.0
    %1633 = vmatpush.xpose.msra.mxu0 0.0
    %1634 = vmatpush.xpose.msra.mxu0 0.0
    %1635 = vmatpush.xpose.msra.mxu0 0.0
    %1636 = vmatpush.xpose.msra.mxu0 0.0
    %1637 = vmatpush.xpose.msra.mxu0 0.0
    %1638 = vmatpush.xpose.msra.mxu0 0.0
    %1639 = vmatpush.xpose.msra.mxu0 0.0
    %1640 = vmatpush.xpose.msra.mxu0 0.0
    %1641 = vmatpush.xpose.msra.mxu0 0.0
    %1642 = vmatpush.xpose.msra.mxu0 0.0
    %1643 = vmatpush.xpose.msra.mxu0 0.0
    %1644 = vmatpush.xpose.msra.mxu0 0.0
    %1645 = vmatpush.xpose.msra.mxu0 0.0
    %1646 = vmatpush.xpose.msra.mxu0 0.0
    %1647 = vmatpush.xpose.msra.mxu0 %v191
    %1648 = vmatmul.f32.gmra.mxu0 %v450
    %v1649 = vpop.f32.mrf.mxu0
    %v1650 = vadd.f32 %v1630, %v1649
    %1651 = vdwg.mxu0
    %1652 = vmatpush.xpose.msra.mxu0 0.0
    %1653 = vmatpush.xpose.msra.mxu0 0.0
    %1654 = vmatpush.xpose.msra.mxu0 0.0
    %1655 = vmatpush.xpose.msra.mxu0 0.0
    %1656 = vmatpush.xpose.msra.mxu0 0.0
    %1657 = vmatpush.xpose.msra.mxu0 0.0
    %1658 = vmatpush.xpose.msra.mxu0 0.0
    %1659 = vmatpush.xpose.msra.mxu0 0.0
    %1660 = vmatpush.xpose.msra.mxu0 0.0
    %1661 = vmatpush.xpose.msra.mxu0 0.0
    %1662 = vmatpush.xpose.msra.mxu0 0.0
    %1663 = vmatpush.xpose.msra.mxu0 0.0
    %1664 = vmatpush.xpose.msra.mxu0 0.0
    %1665 = vmatpush.xpose.msra.mxu0 0.0
    %1666 = vmatpush.xpose.msra.mxu0 0.0
    %1667 = vmatpush.xpose.msra.mxu0 %v192
    %1668 = vmatmul.f32.gmra.mxu0 %v451
    %v1669 = vpop.f32.mrf.mxu0
    %v1670 = vadd.f32 %v1650, %v1669
    %1671 = vdwg.mxu0
    %1672 = vmatpush.xpose.msra.mxu0 0.0
    %1673 = vmatpush.xpose.msra.mxu0 0.0
    %1674 = vmatpush.xpose.msra.mxu0 0.0
    %1675 = vmatpush.xpose.msra.mxu0 0.0
    %1676 = vmatpush.xpose.msra.mxu0 0.0
    %1677 = vmatpush.xpose.msra.mxu0 0.0
    %1678 = vmatpush.xpose.msra.mxu0 0.0
    %1679 = vmatpush.xpose.msra.mxu0 0.0
    %1680 = vmatpush.xpose.msra.mxu0 0.0
    %1681 = vmatpush.xpose.msra.mxu0 0.0
    %1682 = vmatpush.xpose.msra.mxu0 0.0
    %1683 = vmatpush.xpose.msra.mxu0 0.0
    %1684 = vmatpush.xpose.msra.mxu0 0.0
    %1685 = vmatpush.xpose.msra.mxu0 0.0
    %1686 = vmatpush.xpose.msra.mxu0 0.0
    %1687 = vmatpush.xpose.msra.mxu0 %v193
    %1688 = vmatmul.f32.gmra.mxu0 %v452
    %v1689 = vpop.f32.mrf.mxu0
    %v1690 = vadd.f32 %v1670, %v1689
    %1691 = vdwg.mxu0
    %1692 = vmatpush.xpose.msra.mxu0 0.0
    %1693 = vmatpush.xpose.msra.mxu0 0.0
    %1694 = vmatpush.xpose.msra.mxu0 0.0
    %1695 = vmatpush.xpose.msra.mxu0 0.0
    %1696 = vmatpush.xpose.msra.mxu0 0.0
    %1697 = vmatpush.xpose.msra.mxu0 0.0
    %1698 = vmatpush.xpose.msra.mxu0 0.0
    %1699 = vmatpush.xpose.msra.mxu0 0.0
    %1700 = vmatpush.xpose.msra.mxu0 0.0
    %1701 = vmatpush.xpose.msra.mxu0 0.0
    %1702 = vmatpush.xpose.msra.mxu0 0.0
    %1703 = vmatpush.xpose.msra.mxu0 0.0
    %1704 = vmatpush.xpose.msra.mxu0 0.0
    %1705 = vmatpush.xpose.msra.mxu0 0.0
    %1706 = vmatpush.xpose.msra.mxu0 0.0
    %1707 = vmatpush.xpose.msra.mxu0 %v194
    %1708 = vmatmul.f32.gmra.mxu0 %v453
    %v1709 = vpop.f32.mrf.mxu0
    %v1710 = vadd.f32 %v1690, %v1709
    %1711 = vdwg.mxu0
    %1712 = vmatpush.xpose.msra.mxu0 0.0
    %1713 = vmatpush.xpose.msra.mxu0 0.0
    %1714 = vmatpush.xpose.msra.mxu0 0.0
    %1715 = vmatpush.xpose.msra.mxu0 0.0
    %1716 = vmatpush.xpose.msra.mxu0 0.0
    %1717 = vmatpush.xpose.msra.mxu0 0.0
    %1718 = vmatpush.xpose.msra.mxu0 0.0
    %1719 = vmatpush.xpose.msra.mxu0 0.0
    %1720 = vmatpush.xpose.msra.mxu0 0.0
    %1721 = vmatpush.xpose.msra.mxu0 0.0
    %1722 = vmatpush.xpose.msra.mxu0 0.0
    %1723 = vmatpush.xpose.msra.mxu0 0.0
    %1724 = vmatpush.xpose.msra.mxu0 0.0
    %1725 = vmatpush.xpose.msra.mxu0 0.0
    %1726 = vmatpush.xpose.msra.mxu0 0.0
    %1727 = vmatpush.xpose.msra.mxu0 %v195
    %1728 = vmatmul.f32.gmra.mxu0 %v454
    %v1729 = vpop.f32.mrf.mxu0
    %v1730 = vadd.f32 %v1710, %v1729
    %1731 = vdwg.mxu0
    %1732 = vmatpush.xpose.msra.mxu0 0.0
    %1733 = vmatpush.xpose.msra.mxu0 0.0
    %1734 = vmatpush.xpose.msra.mxu0 0.0
    %1735 = vmatpush.xpose.msra.mxu0 0.0
    %1736 = vmatpush.xpose.msra.mxu0 0.0
    %1737 = vmatpush.xpose.msra.mxu0 0.0
    %1738 = vmatpush.xpose.msra.mxu0 0.0
    %1739 = vmatpush.xpose.msra.mxu0 0.0
    %1740 = vmatpush.xpose.msra.mxu0 0.0
    %1741 = vmatpush.xpose.msra.mxu0 0.0
    %1742 = vmatpush.xpose.msra.mxu0 0.0
    %1743 = vmatpush.xpose.msra.mxu0 0.0
    %1744 = vmatpush.xpose.msra.mxu0 0.0
    %1745 = vmatpush.xpose.msra.mxu0 0.0
    %1746 = vmatpush.xpose.msra.mxu0 0.0
    %1747 = vmatpush.xpose.msra.mxu0 %v196
    %1748 = vmatmul.f32.gmra.mxu0 %v455
    %v1749 = vpop.f32.mrf.mxu0
    %v1750 = vadd.f32 %v1730, %v1749
    %1751 = vdwg.mxu0
    %1752 = vmatpush.xpose.msra.mxu0 0.0
    %1753 = vmatpush.xpose.msra.mxu0 0.0
    %1754 = vmatpush.xpose.msra.mxu0 0.0
    %1755 = vmatpush.xpose.msra.mxu0 0.0
    %1756 = vmatpush.xpose.msra.mxu0 0.0
    %1757 = vmatpush.xpose.msra.mxu0 0.0
    %1758 = vmatpush.xpose.msra.mxu0 0.0
    %1759 = vmatpush.xpose.msra.mxu0 0.0
    %1760 = vmatpush.xpose.msra.mxu0 0.0
    %1761 = vmatpush.xpose.msra.mxu0 0.0
    %1762 = vmatpush.xpose.msra.mxu0 0.0
    %1763 = vmatpush.xpose.msra.mxu0 0.0
    %1764 = vmatpush.xpose.msra.mxu0 0.0
    %1765 = vmatpush.xpose.msra.mxu0 0.0
    %1766 = vmatpush.xpose.msra.mxu0 0.0
    %1767 = vmatpush.xpose.msra.mxu0 %v197
    %1768 = vmatmul.f32.gmra.mxu0 %v464
    %v1769 = vpop.f32.mrf.mxu0
    %v1770 = vadd.f32 %v1750, %v1769
    %1771 = vdwg.mxu0
    %1772 = vmatpush.xpose.msra.mxu0 0.0
    %1773 = vmatpush.xpose.msra.mxu0 0.0
    %1774 = vmatpush.xpose.msra.mxu0 0.0
    %1775 = vmatpush.xpose.msra.mxu0 0.0
    %1776 = vmatpush.xpose.msra.mxu0 0.0
    %1777 = vmatpush.xpose.msra.mxu0 0.0
    %1778 = vmatpush.xpose.msra.mxu0 0.0
    %1779 = vmatpush.xpose.msra.mxu0 0.0
    %1780 = vmatpush.xpose.msra.mxu0 0.0
    %1781 = vmatpush.xpose.msra.mxu0 0.0
    %1782 = vmatpush.xpose.msra.mxu0 0.0
    %1783 = vmatpush.xpose.msra.mxu0 0.0
    %1784 = vmatpush.xpose.msra.mxu0 0.0
    %1785 = vmatpush.xpose.msra.mxu0 0.0
    %1786 = vmatpush.xpose.msra.mxu0 0.0
    %1787 = vmatpush.xpose.msra.mxu0 %v198
    %1788 = vmatmul.f32.gmra.mxu0 %v465
    %v1789 = vpop.f32.mrf.mxu0
    %v1790 = vadd.f32 %v1770, %v1789
    %1791 = vdwg.mxu0
    %1792 = vmatpush.xpose.msra.mxu0 0.0
    %1793 = vmatpush.xpose.msra.mxu0 0.0
    %1794 = vmatpush.xpose.msra.mxu0 0.0
    %1795 = vmatpush.xpose.msra.mxu0 0.0
    %1796 = vmatpush.xpose.msra.mxu0 0.0
    %1797 = vmatpush.xpose.msra.mxu0 0.0
    %1798 = vmatpush.xpose.msra.mxu0 0.0
    %1799 = vmatpush.xpose.msra.mxu0 0.0
    %1800 = vmatpush.xpose.msra.mxu0 0.0
    %1801 = vmatpush.xpose.msra.mxu0 0.0
    %1802 = vmatpush.xpose.msra.mxu0 0.0
    %1803 = vmatpush.xpose.msra.mxu0 0.0
    %1804 = vmatpush.xpose.msra.mxu0 0.0
    %1805 = vmatpush.xpose.msra.mxu0 0.0
    %1806 = vmatpush.xpose.msra.mxu0 0.0
    %1807 = vmatpush.xpose.msra.mxu0 %v199
    %1808 = vmatmul.f32.gmra.mxu0 %v466
    %v1809 = vpop.f32.mrf.mxu0
    %v1810 = vadd.f32 %v1790, %v1809
    %1811 = vdwg.mxu0
    %1812 = vmatpush.xpose.msra.mxu0 0.0
    %1813 = vmatpush.xpose.msra.mxu0 0.0
    %1814 = vmatpush.xpose.msra.mxu0 0.0
    %1815 = vmatpush.xpose.msra.mxu0 0.0
    %1816 = vmatpush.xpose.msra.mxu0 0.0
    %1817 = vmatpush.xpose.msra.mxu0 0.0
    %1818 = vmatpush.xpose.msra.mxu0 0.0
    %1819 = vmatpush.xpose.msra.mxu0 0.0
    %1820 = vmatpush.xpose.msra.mxu0 0.0
    %1821 = vmatpush.xpose.msra.mxu0 0.0
    %1822 = vmatpush.xpose.msra.mxu0 0.0
    %1823 = vmatpush.xpose.msra.mxu0 0.0
    %1824 = vmatpush.xpose.msra.mxu0 0.0
    %1825 = vmatpush.xpose.msra.mxu0 0.0
    %1826 = vmatpush.xpose.msra.mxu0 0.0
    %1827 = vmatpush.xpose.msra.mxu0 %v200
    %1828 = vmatmul.f32.gmra.mxu0 %v467
    %v1829 = vpop.f32.mrf.mxu0
    %v1830 = vadd.f32 %v1810, %v1829
    %1831 = vdwg.mxu0
    %1832 = vmatpush.xpose.msra.mxu0 0.0
    %1833 = vmatpush.xpose.msra.mxu0 0.0
    %1834 = vmatpush.xpose.msra.mxu0 0.0
    %1835 = vmatpush.xpose.msra.mxu0 0.0
    %1836 = vmatpush.xpose.msra.mxu0 0.0
    %1837 = vmatpush.xpose.msra.mxu0 0.0
    %1838 = vmatpush.xpose.msra.mxu0 0.0
    %1839 = vmatpush.xpose.msra.mxu0 0.0
    %1840 = vmatpush.xpose.msra.mxu0 0.0
    %1841 = vmatpush.xpose.msra.mxu0 0.0
    %1842 = vmatpush.xpose.msra.mxu0 0.0
    %1843 = vmatpush.xpose.msra.mxu0 0.0
    %1844 = vmatpush.xpose.msra.mxu0 0.0
    %1845 = vmatpush.xpose.msra.mxu0 0.0
    %1846 = vmatpush.xpose.msra.mxu0 0.0
    %1847 = vmatpush.xpose.msra.mxu0 %v201
    %1848 = vmatmul.f32.gmra.mxu0 %v468
    %v1849 = vpop.f32.mrf.mxu0
    %v1850 = vadd.f32 %v1830, %v1849
    %1851 = vdwg.mxu0
    %1852 = vmatpush.xpose.msra.mxu0 0.0
    %1853 = vmatpush.xpose.msra.mxu0 0.0
    %1854 = vmatpush.xpose.msra.mxu0 0.0
    %1855 = vmatpush.xpose.msra.mxu0 0.0
    %1856 = vmatpush.xpose.msra.mxu0 0.0
    %1857 = vmatpush.xpose.msra.mxu0 0.0
    %1858 = vmatpush.xpose.msra.mxu0 0.0
    %1859 = vmatpush.xpose.msra.mxu0 0.0
    %1860 = vmatpush.xpose.msra.mxu0 0.0
    %1861 = vmatpush.xpose.msra.mxu0 0.0
    %1862 = vmatpush.xpose.msra.mxu0 0.0
    %1863 = vmatpush.xpose.msra.mxu0 0.0
    %1864 = vmatpush.xpose.msra.mxu0 0.0
    %1865 = vmatpush.xpose.msra.mxu0 0.0
    %1866 = vmatpush.xpose.msra.mxu0 0.0
    %1867 = vmatpush.xpose.msra.mxu0 %v202
    %1868 = vmatmul.f32.gmra.mxu0 %v469
    %v1869 = vpop.f32.mrf.mxu0
    %v1870 = vadd.f32 %v1850, %v1869
    %1871 = vdwg.mxu0
    %1872 = vmatpush.xpose.msra.mxu0 0.0
    %1873 = vmatpush.xpose.msra.mxu0 0.0
    %1874 = vmatpush.xpose.msra.mxu0 0.0
    %1875 = vmatpush.xpose.msra.mxu0 0.0
    %1876 = vmatpush.xpose.msra.mxu0 0.0
    %1877 = vmatpush.xpose.msra.mxu0 0.0
    %1878 = vmatpush.xpose.msra.mxu0 0.0
    %1879 = vmatpush.xpose.msra.mxu0 0.0
    %1880 = vmatpush.xpose.msra.mxu0 0.0
    %1881 = vmatpush.xpose.msra.mxu0 0.0
    %1882 = vmatpush.xpose.msra.mxu0 0.0
    %1883 = vmatpush.xpose.msra.mxu0 0.0
    %1884 = vmatpush.xpose.msra.mxu0 0.0
    %1885 = vmatpush.xpose.msra.mxu0 0.0
    %1886 = vmatpush.xpose.msra.mxu0 0.0
    %1887 = vmatpush.xpose.msra.mxu0 %v203
    %1888 = vmatmul.f32.gmra.mxu0 %v470
    %v1889 = vpop.f32.mrf.mxu0
    %v1890 = vadd.f32 %v1870, %v1889
    %1891 = vdwg.mxu0
    %1892 = vmatpush.xpose.msra.mxu0 0.0
    %1893 = vmatpush.xpose.msra.mxu0 0.0
    %1894 = vmatpush.xpose.msra.mxu0 0.0
    %1895 = vmatpush.xpose.msra.mxu0 0.0
    %1896 = vmatpush.xpose.msra.mxu0 0.0
    %1897 = vmatpush.xpose.msra.mxu0 0.0
    %1898 = vmatpush.xpose.msra.mxu0 0.0
    %1899 = vmatpush.xpose.msra.mxu0 0.0
    %1900 = vmatpush.xpose.msra.mxu0 0.0
    %1901 = vmatpush.xpose.msra.mxu0 0.0
    %1902 = vmatpush.xpose.msra.mxu0 0.0
    %1903 = vmatpush.xpose.msra.mxu0 0.0
    %1904 = vmatpush.xpose.msra.mxu0 0.0
    %1905 = vmatpush.xpose.msra.mxu0 0.0
    %1906 = vmatpush.xpose.msra.mxu0 0.0
    %1907 = vmatpush.xpose.msra.mxu0 %v204
    %1908 = vmatmul.f32.gmra.mxu0 %v471
    %v1909 = vpop.f32.mrf.mxu0
    %v1910 = vadd.f32 %v1890, %v1909
    %1911 = vdwg.mxu0
    %1912 = vmatpush.xpose.msra.mxu0 0.0
    %1913 = vmatpush.xpose.msra.mxu0 0.0
    %1914 = vmatpush.xpose.msra.mxu0 0.0
    %1915 = vmatpush.xpose.msra.mxu0 0.0
    %1916 = vmatpush.xpose.msra.mxu0 0.0
    %1917 = vmatpush.xpose.msra.mxu0 0.0
    %1918 = vmatpush.xpose.msra.mxu0 0.0
    %1919 = vmatpush.xpose.msra.mxu0 0.0
    %1920 = vmatpush.xpose.msra.mxu0 0.0
    %1921 = vmatpush.xpose.msra.mxu0 0.0
    %1922 = vmatpush.xpose.msra.mxu0 0.0
    %1923 = vmatpush.xpose.msra.mxu0 0.0
    %1924 = vmatpush.xpose.msra.mxu0 0.0
    %1925 = vmatpush.xpose.msra.mxu0 0.0
    %1926 = vmatpush.xpose.msra.mxu0 0.0
    %1927 = vmatpush.xpose.msra.mxu0 %v205
    %1928 = vmatmul.f32.gmra.mxu0 %v480
    %v1929 = vpop.f32.mrf.mxu0
    %v1930 = vadd.f32 %v1910, %v1929
    %1931 = vdwg.mxu0
    %1932 = vmatpush.xpose.msra.mxu0 0.0
    %1933 = vmatpush.xpose.msra.mxu0 0.0
    %1934 = vmatpush.xpose.msra.mxu0 0.0
    %1935 = vmatpush.xpose.msra.mxu0 0.0
    %1936 = vmatpush.xpose.msra.mxu0 0.0
    %1937 = vmatpush.xpose.msra.mxu0 0.0
    %1938 = vmatpush.xpose.msra.mxu0 0.0
    %1939 = vmatpush.xpose.msra.mxu0 0.0
    %1940 = vmatpush.xpose.msra.mxu0 0.0
    %1941 = vmatpush.xpose.msra.mxu0 0.0
    %1942 = vmatpush.xpose.msra.mxu0 0.0
    %1943 = vmatpush.xpose.msra.mxu0 0.0
    %1944 = vmatpush.xpose.msra.mxu0 0.0
    %1945 = vmatpush.xpose.msra.mxu0 0.0
    %1946 = vmatpush.xpose.msra.mxu0 0.0
    %1947 = vmatpush.xpose.msra.mxu0 %v206
    %1948 = vmatmul.f32.gmra.mxu0 %v481
    %v1949 = vpop.f32.mrf.mxu0
    %v1950 = vadd.f32 %v1930, %v1949
    %1951 = vdwg.mxu0
    %1952 = vmatpush.xpose.msra.mxu0 0.0
    %1953 = vmatpush.xpose.msra.mxu0 0.0
    %1954 = vmatpush.xpose.msra.mxu0 0.0
    %1955 = vmatpush.xpose.msra.mxu0 0.0
    %1956 = vmatpush.xpose.msra.mxu0 0.0
    %1957 = vmatpush.xpose.msra.mxu0 0.0
    %1958 = vmatpush.xpose.msra.mxu0 0.0
    %1959 = vmatpush.xpose.msra.mxu0 0.0
    %1960 = vmatpush.xpose.msra.mxu0 0.0
    %1961 = vmatpush.xpose.msra.mxu0 0.0
    %1962 = vmatpush.xpose.msra.mxu0 0.0
    %1963 = vmatpush.xpose.msra.mxu0 0.0
    %1964 = vmatpush.xpose.msra.mxu0 0.0
    %1965 = vmatpush.xpose.msra.mxu0 0.0
    %1966 = vmatpush.xpose.msra.mxu0 0.0
    %1967 = vmatpush.xpose.msra.mxu0 %v207
    %1968 = vmatmul.f32.gmra.mxu0 %v482
    %v1969 = vpop.f32.mrf.mxu0
    %v1970 = vadd.f32 %v1950, %v1969
    %1971 = vdwg.mxu0
    %1972 = vmatpush.xpose.msra.mxu0 0.0
    %1973 = vmatpush.xpose.msra.mxu0 0.0
    %1974 = vmatpush.xpose.msra.mxu0 0.0
    %1975 = vmatpush.xpose.msra.mxu0 0.0
    %1976 = vmatpush.xpose.msra.mxu0 0.0
    %1977 = vmatpush.xpose.msra.mxu0 0.0
    %1978 = vmatpush.xpose.msra.mxu0 0.0
    %1979 = vmatpush.xpose.msra.mxu0 0.0
    %1980 = vmatpush.xpose.msra.mxu0 0.0
    %1981 = vmatpush.xpose.msra.mxu0 0.0
    %1982 = vmatpush.xpose.msra.mxu0 0.0
    %1983 = vmatpush.xpose.msra.mxu0 0.0
    %1984 = vmatpush.xpose.msra.mxu0 0.0
    %1985 = vmatpush.xpose.msra.mxu0 0.0
    %1986 = vmatpush.xpose.msra.mxu0 0.0
    %1987 = vmatpush.xpose.msra.mxu0 %v208
    %1988 = vmatmul.f32.gmra.mxu0 %v483
    %v1989 = vpop.f32.mrf.mxu0
    %v1990 = vadd.f32 %v1970, %v1989
    %1991 = vdwg.mxu0
    %1992 = vmatpush.xpose.msra.mxu0 0.0
    %1993 = vmatpush.xpose.msra.mxu0 0.0
    %1994 = vmatpush.xpose.msra.mxu0 0.0
    %1995 = vmatpush.xpose.msra.mxu0 0.0
    %1996 = vmatpush.xpose.msra.mxu0 0.0
    %1997 = vmatpush.xpose.msra.mxu0 0.0
    %1998 = vmatpush.xpose.msra.mxu0 0.0
    %1999 = vmatpush.xpose.msra.mxu0 0.0
    %2000 = vmatpush.xpose.msra.mxu0 0.0
    %2001 = vmatpush.xpose.msra.mxu0 0.0
    %2002 = vmatpush.xpose.msra.mxu0 0.0
    %2003 = vmatpush.xpose.msra.mxu0 0.0
    %2004 = vmatpush.xpose.msra.mxu0 0.0
    %2005 = vmatpush.xpose.msra.mxu0 0.0
    %2006 = vmatpush.xpose.msra.mxu0 0.0
    %2007 = vmatpush.xpose.msra.mxu0 %v209
    %2008 = vmatmul.f32.gmra.mxu0 %v484
    %v2009 = vpop.f32.mrf.mxu0
    %v2010 = vadd.f32 %v1990, %v2009
    %2011 = vdwg.mxu0
    %2012 = vmatpush.xpose.msra.mxu0 0.0
    %2013 = vmatpush.xpose.msra.mxu0 0.0
    %2014 = vmatpush.xpose.msra.mxu0 0.0
    %2015 = vmatpush.xpose.msra.mxu0 0.0
    %2016 = vmatpush.xpose.msra.mxu0 0.0
    %2017 = vmatpush.xpose.msra.mxu0 0.0
    %2018 = vmatpush.xpose.msra.mxu0 0.0
    %2019 = vmatpush.xpose.msra.mxu0 0.0
    %2020 = vmatpush.xpose.msra.mxu0 0.0
    %2021 = vmatpush.xpose.msra.mxu0 0.0
    %2022 = vmatpush.xpose.msra.mxu0 0.0
    %2023 = vmatpush.xpose.msra.mxu0 0.0
    %2024 = vmatpush.xpose.msra.mxu0 0.0
    %2025 = vmatpush.xpose.msra.mxu0 0.0
    %2026 = vmatpush.xpose.msra.mxu0 0.0
    %2027 = vmatpush.xpose.msra.mxu0 %v210
    %2028 = vmatmul.f32.gmra.mxu0 %v485
    %v2029 = vpop.f32.mrf.mxu0
    %v2030 = vadd.f32 %v2010, %v2029
    %2031 = vdwg.mxu0
    %2032 = vmatpush.xpose.msra.mxu0 0.0
    %2033 = vmatpush.xpose.msra.mxu0 0.0
    %2034 = vmatpush.xpose.msra.mxu0 0.0
    %2035 = vmatpush.xpose.msra.mxu0 0.0
    %2036 = vmatpush.xpose.msra.mxu0 0.0
    %2037 = vmatpush.xpose.msra.mxu0 0.0
    %2038 = vmatpush.xpose.msra.mxu0 0.0
    %2039 = vmatpush.xpose.msra.mxu0 0.0
    %2040 = vmatpush.xpose.msra.mxu0 0.0
    %2041 = vmatpush.xpose.msra.mxu0 0.0
    %2042 = vmatpush.xpose.msra.mxu0 0.0
    %2043 = vmatpush.xpose.msra.mxu0 0.0
    %2044 = vmatpush.xpose.msra.mxu0 0.0
    %2045 = vmatpush.xpose.msra.mxu0 0.0
    %2046 = vmatpush.xpose.msra.mxu0 0.0
    %2047 = vmatpush.xpose.msra.mxu0 %v211
    %2048 = vmatmul.f32.gmra.mxu0 %v486
    %v2049 = vpop.f32.mrf.mxu0
    %v2050 = vadd.f32 %v2030, %v2049
    %2051 = vdwg.mxu0
    %2052 = vmatpush.xpose.msra.mxu0 0.0
    %2053 = vmatpush.xpose.msra.mxu0 0.0
    %2054 = vmatpush.xpose.msra.mxu0 0.0
    %2055 = vmatpush.xpose.msra.mxu0 0.0
    %2056 = vmatpush.xpose.msra.mxu0 0.0
    %2057 = vmatpush.xpose.msra.mxu0 0.0
    %2058 = vmatpush.xpose.msra.mxu0 0.0
    %2059 = vmatpush.xpose.msra.mxu0 0.0
    %2060 = vmatpush.xpose.msra.mxu0 0.0
    %2061 = vmatpush.xpose.msra.mxu0 0.0
    %2062 = vmatpush.xpose.msra.mxu0 0.0
    %2063 = vmatpush.xpose.msra.mxu0 0.0
    %2064 = vmatpush.xpose.msra.mxu0 0.0
    %2065 = vmatpush.xpose.msra.mxu0 0.0
    %2066 = vmatpush.xpose.msra.mxu0 0.0
    %2067 = vmatpush.xpose.msra.mxu0 %v212
    %2068 = vmatmul.f32.gmra.mxu0 %v487
    %v2069 = vpop.f32.mrf.mxu0
    %v2070 = vadd.f32 %v2050, %v2069
    %2071 = vdwg.mxu0
    %2072 = vmatpush.xpose.msra.mxu0 0.0
    %2073 = vmatpush.xpose.msra.mxu0 0.0
    %2074 = vmatpush.xpose.msra.mxu0 0.0
    %2075 = vmatpush.xpose.msra.mxu0 0.0
    %2076 = vmatpush.xpose.msra.mxu0 0.0
    %2077 = vmatpush.xpose.msra.mxu0 0.0
    %2078 = vmatpush.xpose.msra.mxu0 0.0
    %2079 = vmatpush.xpose.msra.mxu0 0.0
    %2080 = vmatpush.xpose.msra.mxu0 0.0
    %2081 = vmatpush.xpose.msra.mxu0 0.0
    %2082 = vmatpush.xpose.msra.mxu0 0.0
    %2083 = vmatpush.xpose.msra.mxu0 0.0
    %2084 = vmatpush.xpose.msra.mxu0 0.0
    %2085 = vmatpush.xpose.msra.mxu0 0.0
    %2086 = vmatpush.xpose.msra.mxu0 0.0
    %2087 = vmatpush.xpose.msra.mxu0 %v213
    %2088 = vmatmul.f32.gmra.mxu0 %v496
    %v2089 = vpop.f32.mrf.mxu0
    %v2090 = vadd.f32 %v2070, %v2089
    %2091 = vdwg.mxu0
    %2092 = vmatpush.xpose.msra.mxu0 0.0
    %2093 = vmatpush.xpose.msra.mxu0 0.0
    %2094 = vmatpush.xpose.msra.mxu0 0.0
    %2095 = vmatpush.xpose.msra.mxu0 0.0
    %2096 = vmatpush.xpose.msra.mxu0 0.0
    %2097 = vmatpush.xpose.msra.mxu0 0.0
    %2098 = vmatpush.xpose.msra.mxu0 0.0
    %2099 = vmatpush.xpose.msra.mxu0 0.0
    %2100 = vmatpush.xpose.msra.mxu0 0.0
    %2101 = vmatpush.xpose.msra.mxu0 0.0
    %2102 = vmatpush.xpose.msra.mxu0 0.0
    %2103 = vmatpush.xpose.msra.mxu0 0.0
    %2104 = vmatpush.xpose.msra.mxu0 0.0
    %2105 = vmatpush.xpose.msra.mxu0 0.0
    %2106 = vmatpush.xpose.msra.mxu0 0.0
    %2107 = vmatpush.xpose.msra.mxu0 %v214
    %2108 = vmatmul.f32.gmra.mxu0 %v497
    %v2109 = vpop.f32.mrf.mxu0
    %v2110 = vadd.f32 %v2090, %v2109
    %2111 = vdwg.mxu0
    %2112 = vmatpush.xpose.msra.mxu0 0.0
    %2113 = vmatpush.xpose.msra.mxu0 0.0
    %2114 = vmatpush.xpose.msra.mxu0 0.0
    %2115 = vmatpush.xpose.msra.mxu0 0.0
    %2116 = vmatpush.xpose.msra.mxu0 0.0
    %2117 = vmatpush.xpose.msra.mxu0 0.0
    %2118 = vmatpush.xpose.msra.mxu0 0.0
    %2119 = vmatpush.xpose.msra.mxu0 0.0
    %2120 = vmatpush.xpose.msra.mxu0 0.0
    %2121 = vmatpush.xpose.msra.mxu0 0.0
    %2122 = vmatpush.xpose.msra.mxu0 0.0
    %2123 = vmatpush.xpose.msra.mxu0 0.0
    %2124 = vmatpush.xpose.msra.mxu0 0.0
    %2125 = vmatpush.xpose.msra.mxu0 0.0
    %2126 = vmatpush.xpose.msra.mxu0 0.0
    %2127 = vmatpush.xpose.msra.mxu0 %v215
    %2128 = vmatmul.f32.gmra.mxu0 %v498
    %v2129 = vpop.f32.mrf.mxu0
    %v2130 = vadd.f32 %v2110, %v2129
    %2131 = vdwg.mxu0
    %2132 = vmatpush.xpose.msra.mxu0 0.0
    %2133 = vmatpush.xpose.msra.mxu0 0.0
    %2134 = vmatpush.xpose.msra.mxu0 0.0
    %2135 = vmatpush.xpose.msra.mxu0 0.0
    %2136 = vmatpush.xpose.msra.mxu0 0.0
    %2137 = vmatpush.xpose.msra.mxu0 0.0
    %2138 = vmatpush.xpose.msra.mxu0 0.0
    %2139 = vmatpush.xpose.msra.mxu0 0.0
    %2140 = vmatpush.xpose.msra.mxu0 0.0
    %2141 = vmatpush.xpose.msra.mxu0 0.0
    %2142 = vmatpush.xpose.msra.mxu0 0.0
    %2143 = vmatpush.xpose.msra.mxu0 0.0
    %2144 = vmatpush.xpose.msra.mxu0 0.0
    %2145 = vmatpush.xpose.msra.mxu0 0.0
    %2146 = vmatpush.xpose.msra.mxu0 0.0
    %2147 = vmatpush.xpose.msra.mxu0 %v216
    %2148 = vmatmul.f32.gmra.mxu0 %v499
    %v2149 = vpop.f32.mrf.mxu0
    %v2150 = vadd.f32 %v2130, %v2149
    %2151 = vdwg.mxu0
    %2152 = vmatpush.xpose.msra.mxu0 0.0
    %2153 = vmatpush.xpose.msra.mxu0 0.0
    %2154 = vmatpush.xpose.msra.mxu0 0.0
    %2155 = vmatpush.xpose.msra.mxu0 0.0
    %2156 = vmatpush.xpose.msra.mxu0 0.0
    %2157 = vmatpush.xpose.msra.mxu0 0.0
    %2158 = vmatpush.xpose.msra.mxu0 0.0
    %2159 = vmatpush.xpose.msra.mxu0 0.0
    %2160 = vmatpush.xpose.msra.mxu0 0.0
    %2161 = vmatpush.xpose.msra.mxu0 0.0
    %2162 = vmatpush.xpose.msra.mxu0 0.0
    %2163 = vmatpush.xpose.msra.mxu0 0.0
    %2164 = vmatpush.xpose.msra.mxu0 0.0
    %2165 = vmatpush.xpose.msra.mxu0 0.0
    %2166 = vmatpush.xpose.msra.mxu0 0.0
    %2167 = vmatpush.xpose.msra.mxu0 %v217
    %2168 = vmatmul.f32.gmra.mxu0 %v500
    %v2169 = vpop.f32.mrf.mxu0
    %v2170 = vadd.f32 %v2150, %v2169
    %2171 = vdwg.mxu0
    %2172 = vmatpush.xpose.msra.mxu0 0.0
    %2173 = vmatpush.xpose.msra.mxu0 0.0
    %2174 = vmatpush.xpose.msra.mxu0 0.0
    %2175 = vmatpush.xpose.msra.mxu0 0.0
    %2176 = vmatpush.xpose.msra.mxu0 0.0
    %2177 = vmatpush.xpose.msra.mxu0 0.0
    %2178 = vmatpush.xpose.msra.mxu0 0.0
    %2179 = vmatpush.xpose.msra.mxu0 0.0
    %2180 = vmatpush.xpose.msra.mxu0 0.0
    %2181 = vmatpush.xpose.msra.mxu0 0.0
    %2182 = vmatpush.xpose.msra.mxu0 0.0
    %2183 = vmatpush.xpose.msra.mxu0 0.0
    %2184 = vmatpush.xpose.msra.mxu0 0.0
    %2185 = vmatpush.xpose.msra.mxu0 0.0
    %2186 = vmatpush.xpose.msra.mxu0 0.0
    %2187 = vmatpush.xpose.msra.mxu0 %v218
    %2188 = vmatmul.f32.gmra.mxu0 %v501
    %v2189 = vpop.f32.mrf.mxu0
    %v2190 = vadd.f32 %v2170, %v2189
    %2191 = vdwg.mxu0
    %2192 = vmatpush.xpose.msra.mxu0 0.0
    %2193 = vmatpush.xpose.msra.mxu0 0.0
    %2194 = vmatpush.xpose.msra.mxu0 0.0
    %2195 = vmatpush.xpose.msra.mxu0 0.0
    %2196 = vmatpush.xpose.msra.mxu0 0.0
    %2197 = vmatpush.xpose.msra.mxu0 0.0
    %2198 = vmatpush.xpose.msra.mxu0 0.0
    %2199 = vmatpush.xpose.msra.mxu0 0.0
    %2200 = vmatpush.xpose.msra.mxu0 0.0
    %2201 = vmatpush.xpose.msra.mxu0 0.0
    %2202 = vmatpush.xpose.msra.mxu0 0.0
    %2203 = vmatpush.xpose.msra.mxu0 0.0
    %2204 = vmatpush.xpose.msra.mxu0 0.0
    %2205 = vmatpush.xpose.msra.mxu0 0.0
    %2206 = vmatpush.xpose.msra.mxu0 0.0
    %2207 = vmatpush.xpose.msra.mxu0 %v219
    %2208 = vmatmul.f32.gmra.mxu0 %v502
    %v2209 = vpop.f32.mrf.mxu0
    %v2210 = vadd.f32 %v2190, %v2209
    %2211 = vdwg.mxu0
    %2212 = vmatpush.xpose.msra.mxu0 0.0
    %2213 = vmatpush.xpose.msra.mxu0 0.0
    %2214 = vmatpush.xpose.msra.mxu0 0.0
    %2215 = vmatpush.xpose.msra.mxu0 0.0
    %2216 = vmatpush.xpose.msra.mxu0 0.0
    %2217 = vmatpush.xpose.msra.mxu0 0.0
    %2218 = vmatpush.xpose.msra.mxu0 0.0
    %2219 = vmatpush.xpose.msra.mxu0 0.0
    %2220 = vmatpush.xpose.msra.mxu0 0.0
    %2221 = vmatpush.xpose.msra.mxu0 0.0
    %2222 = vmatpush.xpose.msra.mxu0 0.0
    %2223 = vmatpush.xpose.msra.mxu0 0.0
    %2224 = vmatpush.xpose.msra.mxu0 0.0
    %2225 = vmatpush.xpose.msra.mxu0 0.0
    %2226 = vmatpush.xpose.msra.mxu0 0.0
    %2227 = vmatpush.xpose.msra.mxu0 %v220
    %2228 = vmatmul.f32.gmra.mxu0 %v503
    %v2229 = vpop.f32.mrf.mxu0
    %v2230 = vadd.f32 %v2210, %v2229
    %2231 = vdwg.mxu0
    %2232 = vmatpush.xpose.msra.mxu0 0.0
    %2233 = vmatpush.xpose.msra.mxu0 0.0
    %2234 = vmatpush.xpose.msra.mxu0 0.0
    %2235 = vmatpush.xpose.msra.mxu0 0.0
    %2236 = vmatpush.xpose.msra.mxu0 0.0
    %2237 = vmatpush.xpose.msra.mxu0 0.0
    %2238 = vmatpush.xpose.msra.mxu0 0.0
    %2239 = vmatpush.xpose.msra.mxu0 0.0
    %2240 = vmatpush.xpose.msra.mxu0 0.0
    %2241 = vmatpush.xpose.msra.mxu0 0.0
    %2242 = vmatpush.xpose.msra.mxu0 0.0
    %2243 = vmatpush.xpose.msra.mxu0 0.0
    %2244 = vmatpush.xpose.msra.mxu0 0.0
    %2245 = vmatpush.xpose.msra.mxu0 0.0
    %2246 = vmatpush.xpose.msra.mxu0 0.0
    %2247 = vmatpush.xpose.msra.mxu0 %v221
    %2248 = vmatmul.f32.gmra.mxu0 %v512
    %v2249 = vpop.f32.mrf.mxu0
    %v2250 = vadd.f32 %v2230, %v2249
    %2251 = vdwg.mxu0
    %2252 = vmatpush.xpose.msra.mxu0 0.0
    %2253 = vmatpush.xpose.msra.mxu0 0.0
    %2254 = vmatpush.xpose.msra.mxu0 0.0
    %2255 = vmatpush.xpose.msra.mxu0 0.0
    %2256 = vmatpush.xpose.msra.mxu0 0.0
    %2257 = vmatpush.xpose.msra.mxu0 0.0
    %2258 = vmatpush.xpose.msra.mxu0 0.0
    %2259 = vmatpush.xpose.msra.mxu0 0.0
    %2260 = vmatpush.xpose.msra.mxu0 0.0
    %2261 = vmatpush.xpose.msra.mxu0 0.0
    %2262 = vmatpush.xpose.msra.mxu0 0.0
    %2263 = vmatpush.xpose.msra.mxu0 0.0
    %2264 = vmatpush.xpose.msra.mxu0 0.0
    %2265 = vmatpush.xpose.msra.mxu0 0.0
    %2266 = vmatpush.xpose.msra.mxu0 0.0
    %2267 = vmatpush.xpose.msra.mxu0 %v222
    %2268 = vmatmul.f32.gmra.mxu0 %v513
    %v2269 = vpop.f32.mrf.mxu0
    %v2270 = vadd.f32 %v2250, %v2269
    %2271 = vdwg.mxu0
    %2272 = vmatpush.xpose.msra.mxu0 0.0
    %2273 = vmatpush.xpose.msra.mxu0 0.0
    %2274 = vmatpush.xpose.msra.mxu0 0.0
    %2275 = vmatpush.xpose.msra.mxu0 0.0
    %2276 = vmatpush.xpose.msra.mxu0 0.0
    %2277 = vmatpush.xpose.msra.mxu0 0.0
    %2278 = vmatpush.xpose.msra.mxu0 0.0
    %2279 = vmatpush.xpose.msra.mxu0 0.0
    %2280 = vmatpush.xpose.msra.mxu0 0.0
    %2281 = vmatpush.xpose.msra.mxu0 0.0
    %2282 = vmatpush.xpose.msra.mxu0 0.0
    %2283 = vmatpush.xpose.msra.mxu0 0.0
    %2284 = vmatpush.xpose.msra.mxu0 0.0
    %2285 = vmatpush.xpose.msra.mxu0 0.0
    %2286 = vmatpush.xpose.msra.mxu0 0.0
    %2287 = vmatpush.xpose.msra.mxu0 %v223
    %2288 = vmatmul.f32.gmra.mxu0 %v514
    %v2289 = vpop.f32.mrf.mxu0
    %v2290 = vadd.f32 %v2270, %v2289
    %2291 = vdwg.mxu0
    %2292 = vmatpush.xpose.msra.mxu0 0.0
    %2293 = vmatpush.xpose.msra.mxu0 0.0
    %2294 = vmatpush.xpose.msra.mxu0 0.0
    %2295 = vmatpush.xpose.msra.mxu0 0.0
    %2296 = vmatpush.xpose.msra.mxu0 0.0
    %2297 = vmatpush.xpose.msra.mxu0 0.0
    %2298 = vmatpush.xpose.msra.mxu0 0.0
    %2299 = vmatpush.xpose.msra.mxu0 0.0
    %2300 = vmatpush.xpose.msra.mxu0 0.0
    %2301 = vmatpush.xpose.msra.mxu0 0.0
    %2302 = vmatpush.xpose.msra.mxu0 0.0
    %2303 = vmatpush.xpose.msra.mxu0 0.0
    %2304 = vmatpush.xpose.msra.mxu0 0.0
    %2305 = vmatpush.xpose.msra.mxu0 0.0
    %2306 = vmatpush.xpose.msra.mxu0 0.0
    %2307 = vmatpush.xpose.msra.mxu0 %v224
    %2308 = vmatmul.f32.gmra.mxu0 %v515
    %v2309 = vpop.f32.mrf.mxu0
    %v2310 = vadd.f32 %v2290, %v2309
    %2311 = vdwg.mxu0
    %2312 = vmatpush.xpose.msra.mxu0 0.0
    %2313 = vmatpush.xpose.msra.mxu0 0.0
    %2314 = vmatpush.xpose.msra.mxu0 0.0
    %2315 = vmatpush.xpose.msra.mxu0 0.0
    %2316 = vmatpush.xpose.msra.mxu0 0.0
    %2317 = vmatpush.xpose.msra.mxu0 0.0
    %2318 = vmatpush.xpose.msra.mxu0 0.0
    %2319 = vmatpush.xpose.msra.mxu0 0.0
    %2320 = vmatpush.xpose.msra.mxu0 0.0
    %2321 = vmatpush.xpose.msra.mxu0 0.0
    %2322 = vmatpush.xpose.msra.mxu0 0.0
    %2323 = vmatpush.xpose.msra.mxu0 0.0
    %2324 = vmatpush.xpose.msra.mxu0 0.0
    %2325 = vmatpush.xpose.msra.mxu0 0.0
    %2326 = vmatpush.xpose.msra.mxu0 0.0
    %2327 = vmatpush.xpose.msra.mxu0 %v225
    %2328 = vmatmul.f32.gmra.mxu0 %v516
    %v2329 = vpop.f32.mrf.mxu0
    %v2330 = vadd.f32 %v2310, %v2329
    %2331 = vdwg.mxu0
    %2332 = vmatpush.xpose.msra.mxu0 0.0
    %2333 = vmatpush.xpose.msra.mxu0 0.0
    %2334 = vmatpush.xpose.msra.mxu0 0.0
    %2335 = vmatpush.xpose.msra.mxu0 0.0
    %2336 = vmatpush.xpose.msra.mxu0 0.0
    %2337 = vmatpush.xpose.msra.mxu0 0.0
    %2338 = vmatpush.xpose.msra.mxu0 0.0
    %2339 = vmatpush.xpose.msra.mxu0 0.0
    %2340 = vmatpush.xpose.msra.mxu0 0.0
    %2341 = vmatpush.xpose.msra.mxu0 0.0
    %2342 = vmatpush.xpose.msra.mxu0 0.0
    %2343 = vmatpush.xpose.msra.mxu0 0.0
    %2344 = vmatpush.xpose.msra.mxu0 0.0
    %2345 = vmatpush.xpose.msra.mxu0 0.0
    %2346 = vmatpush.xpose.msra.mxu0 0.0
    %2347 = vmatpush.xpose.msra.mxu0 %v226
    %2348 = vmatmul.f32.gmra.mxu0 %v517
    %v2349 = vpop.f32.mrf.mxu0
    %v2350 = vadd.f32 %v2330, %v2349
    %2351 = vdwg.mxu0
    %2352 = vmatpush.xpose.msra.mxu0 0.0
    %2353 = vmatpush.xpose.msra.mxu0 0.0
    %2354 = vmatpush.xpose.msra.mxu0 0.0
    %2355 = vmatpush.xpose.msra.mxu0 0.0
    %2356 = vmatpush.xpose.msra.mxu0 0.0
    %2357 = vmatpush.xpose.msra.mxu0 0.0
    %2358 = vmatpush.xpose.msra.mxu0 0.0
    %2359 = vmatpush.xpose.msra.mxu0 0.0
    %2360 = vmatpush.xpose.msra.mxu0 0.0
    %2361 = vmatpush.xpose.msra.mxu0 0.0
    %2362 = vmatpush.xpose.msra.mxu0 0.0
    %2363 = vmatpush.xpose.msra.mxu0 0.0
    %2364 = vmatpush.xpose.msra.mxu0 0.0
    %2365 = vmatpush.xpose.msra.mxu0 0.0
    %2366 = vmatpush.xpose.msra.mxu0 0.0
    %2367 = vmatpush.xpose.msra.mxu0 %v227
    %2368 = vmatmul.f32.gmra.mxu0 %v518
    %v2369 = vpop.f32.mrf.mxu0
    %v2370 = vadd.f32 %v2350, %v2369
    %2371 = vdwg.mxu0
    %2372 = vmatpush.xpose.msra.mxu0 0.0
    %2373 = vmatpush.xpose.msra.mxu0 0.0
    %2374 = vmatpush.xpose.msra.mxu0 0.0
    %2375 = vmatpush.xpose.msra.mxu0 0.0
    %2376 = vmatpush.xpose.msra.mxu0 0.0
    %2377 = vmatpush.xpose.msra.mxu0 0.0
    %2378 = vmatpush.xpose.msra.mxu0 0.0
    %2379 = vmatpush.xpose.msra.mxu0 0.0
    %2380 = vmatpush.xpose.msra.mxu0 0.0
    %2381 = vmatpush.xpose.msra.mxu0 0.0
    %2382 = vmatpush.xpose.msra.mxu0 0.0
    %2383 = vmatpush.xpose.msra.mxu0 0.0
    %2384 = vmatpush.xpose.msra.mxu0 0.0
    %2385 = vmatpush.xpose.msra.mxu0 0.0
    %2386 = vmatpush.xpose.msra.mxu0 0.0
    %2387 = vmatpush.xpose.msra.mxu0 %v228
    %2388 = vmatmul.f32.gmra.mxu0 %v519
    %v2389 = vpop.f32.mrf.mxu0
    %v2390 = vadd.f32 %v2370, %v2389
    %2391 = vdwg.mxu0
    %2392 = vmatpush.xpose.msra.mxu0 0.0
    %2393 = vmatpush.xpose.msra.mxu0 0.0
    %2394 = vmatpush.xpose.msra.mxu0 0.0
    %2395 = vmatpush.xpose.msra.mxu0 0.0
    %2396 = vmatpush.xpose.msra.mxu0 0.0
    %2397 = vmatpush.xpose.msra.mxu0 0.0
    %2398 = vmatpush.xpose.msra.mxu0 0.0
    %2399 = vmatpush.xpose.msra.mxu0 0.0
    %2400 = vmatpush.xpose.msra.mxu0 0.0
    %2401 = vmatpush.xpose.msra.mxu0 0.0
    %2402 = vmatpush.xpose.msra.mxu0 0.0
    %2403 = vmatpush.xpose.msra.mxu0 0.0
    %2404 = vmatpush.xpose.msra.mxu0 0.0
    %2405 = vmatpush.xpose.msra.mxu0 0.0
    %2406 = vmatpush.xpose.msra.mxu0 0.0
    %2407 = vmatpush.xpose.msra.mxu0 %v229
    %2408 = vmatmul.f32.gmra.mxu0 %v528
    %v2409 = vpop.f32.mrf.mxu0
    %v2410 = vadd.f32 %v2390, %v2409
    %2411 = vdwg.mxu0
    %2412 = vmatpush.xpose.msra.mxu0 0.0
    %2413 = vmatpush.xpose.msra.mxu0 0.0
    %2414 = vmatpush.xpose.msra.mxu0 0.0
    %2415 = vmatpush.xpose.msra.mxu0 0.0
    %2416 = vmatpush.xpose.msra.mxu0 0.0
    %2417 = vmatpush.xpose.msra.mxu0 0.0
    %2418 = vmatpush.xpose.msra.mxu0 0.0
    %2419 = vmatpush.xpose.msra.mxu0 0.0
    %2420 = vmatpush.xpose.msra.mxu0 0.0
    %2421 = vmatpush.xpose.msra.mxu0 0.0
    %2422 = vmatpush.xpose.msra.mxu0 0.0
    %2423 = vmatpush.xpose.msra.mxu0 0.0
    %2424 = vmatpush.xpose.msra.mxu0 0.0
    %2425 = vmatpush.xpose.msra.mxu0 0.0
    %2426 = vmatpush.xpose.msra.mxu0 0.0
    %2427 = vmatpush.xpose.msra.mxu0 %v230
    %2428 = vmatmul.f32.gmra.mxu0 %v529
    %v2429 = vpop.f32.mrf.mxu0
    %v2430 = vadd.f32 %v2410, %v2429
    %2431 = vdwg.mxu0
    %2432 = vmatpush.xpose.msra.mxu0 0.0
    %2433 = vmatpush.xpose.msra.mxu0 0.0
    %2434 = vmatpush.xpose.msra.mxu0 0.0
    %2435 = vmatpush.xpose.msra.mxu0 0.0
    %2436 = vmatpush.xpose.msra.mxu0 0.0
    %2437 = vmatpush.xpose.msra.mxu0 0.0
    %2438 = vmatpush.xpose.msra.mxu0 0.0
    %2439 = vmatpush.xpose.msra.mxu0 0.0
    %2440 = vmatpush.xpose.msra.mxu0 0.0
    %2441 = vmatpush.xpose.msra.mxu0 0.0
    %2442 = vmatpush.xpose.msra.mxu0 0.0
    %2443 = vmatpush.xpose.msra.mxu0 0.0
    %2444 = vmatpush.xpose.msra.mxu0 0.0
    %2445 = vmatpush.xpose.msra.mxu0 0.0
    %2446 = vmatpush.xpose.msra.mxu0 0.0
    %2447 = vmatpush.xpose.msra.mxu0 %v231
    %2448 = vmatmul.f32.gmra.mxu0 %v530
    %v2449 = vpop.f32.mrf.mxu0
    %v2450 = vadd.f32 %v2430, %v2449
    %2451 = vdwg.mxu0
    %2452 = vmatpush.xpose.msra.mxu0 0.0
    %2453 = vmatpush.xpose.msra.mxu0 0.0
    %2454 = vmatpush.xpose.msra.mxu0 0.0
    %2455 = vmatpush.xpose.msra.mxu0 0.0
    %2456 = vmatpush.xpose.msra.mxu0 0.0
    %2457 = vmatpush.xpose.msra.mxu0 0.0
    %2458 = vmatpush.xpose.msra.mxu0 0.0
    %2459 = vmatpush.xpose.msra.mxu0 0.0
    %2460 = vmatpush.xpose.msra.mxu0 0.0
    %2461 = vmatpush.xpose.msra.mxu0 0.0
    %2462 = vmatpush.xpose.msra.mxu0 0.0
    %2463 = vmatpush.xpose.msra.mxu0 0.0
    %2464 = vmatpush.xpose.msra.mxu0 0.0
    %2465 = vmatpush.xpose.msra.mxu0 0.0
    %2466 = vmatpush.xpose.msra.mxu0 0.0
    %2467 = vmatpush.xpose.msra.mxu0 %v232
    %2468 = vmatmul.f32.gmra.mxu0 %v531
    %v2469 = vpop.f32.mrf.mxu0
    %v2470 = vadd.f32 %v2450, %v2469
    %2471 = vdwg.mxu0
    %2472 = vmatpush.xpose.msra.mxu0 0.0
    %2473 = vmatpush.xpose.msra.mxu0 0.0
    %2474 = vmatpush.xpose.msra.mxu0 0.0
    %2475 = vmatpush.xpose.msra.mxu0 0.0
    %2476 = vmatpush.xpose.msra.mxu0 0.0
    %2477 = vmatpush.xpose.msra.mxu0 0.0
    %2478 = vmatpush.xpose.msra.mxu0 0.0
    %2479 = vmatpush.xpose.msra.mxu0 0.0
    %2480 = vmatpush.xpose.msra.mxu0 0.0
    %2481 = vmatpush.xpose.msra.mxu0 0.0
    %2482 = vmatpush.xpose.msra.mxu0 0.0
    %2483 = vmatpush.xpose.msra.mxu0 0.0
    %2484 = vmatpush.xpose.msra.mxu0 0.0
    %2485 = vmatpush.xpose.msra.mxu0 0.0
    %2486 = vmatpush.xpose.msra.mxu0 0.0
    %2487 = vmatpush.xpose.msra.mxu0 %v233
    %2488 = vmatmul.f32.gmra.mxu0 %v532
    %v2489 = vpop.f32.mrf.mxu0
    %v2490 = vadd.f32 %v2470, %v2489
    %2491 = vdwg.mxu0
    %2492 = vmatpush.xpose.msra.mxu0 0.0
    %2493 = vmatpush.xpose.msra.mxu0 0.0
    %2494 = vmatpush.xpose.msra.mxu0 0.0
    %2495 = vmatpush.xpose.msra.mxu0 0.0
    %2496 = vmatpush.xpose.msra.mxu0 0.0
    %2497 = vmatpush.xpose.msra.mxu0 0.0
    %2498 = vmatpush.xpose.msra.mxu0 0.0
    %2499 = vmatpush.xpose.msra.mxu0 0.0
    %2500 = vmatpush.xpose.msra.mxu0 0.0
    %2501 = vmatpush.xpose.msra.mxu0 0.0
    %2502 = vmatpush.xpose.msra.mxu0 0.0
    %2503 = vmatpush.xpose.msra.mxu0 0.0
    %2504 = vmatpush.xpose.msra.mxu0 0.0
    %2505 = vmatpush.xpose.msra.mxu0 0.0
    %2506 = vmatpush.xpose.msra.mxu0 0.0
    %2507 = vmatpush.xpose.msra.mxu0 %v234
    %2508 = vmatmul.f32.gmra.mxu0 %v533
    %v2509 = vpop.f32.mrf.mxu0
    %v2510 = vadd.f32 %v2490, %v2509
    %2511 = vdwg.mxu0
    %2512 = vmatpush.xpose.msra.mxu0 0.0
    %2513 = vmatpush.xpose.msra.mxu0 0.0
    %2514 = vmatpush.xpose.msra.mxu0 0.0
    %2515 = vmatpush.xpose.msra.mxu0 0.0
    %2516 = vmatpush.xpose.msra.mxu0 0.0
    %2517 = vmatpush.xpose.msra.mxu0 0.0
    %2518 = vmatpush.xpose.msra.mxu0 0.0
    %2519 = vmatpush.xpose.msra.mxu0 0.0
    %2520 = vmatpush.xpose.msra.mxu0 0.0
    %2521 = vmatpush.xpose.msra.mxu0 0.0
    %2522 = vmatpush.xpose.msra.mxu0 0.0
    %2523 = vmatpush.xpose.msra.mxu0 0.0
    %2524 = vmatpush.xpose.msra.mxu0 0.0
    %2525 = vmatpush.xpose.msra.mxu0 0.0
    %2526 = vmatpush.xpose.msra.mxu0 0.0
    %2527 = vmatpush.xpose.msra.mxu0 %v235
    %2528 = vmatmul.f32.gmra.mxu0 %v534
    %v2529 = vpop.f32.mrf.mxu0
    %v2530 = vadd.f32 %v2510, %v2529
    %2531 = vdwg.mxu0
    %2532 = vmatpush.xpose.msra.mxu0 0.0
    %2533 = vmatpush.xpose.msra.mxu0 0.0
    %2534 = vmatpush.xpose.msra.mxu0 0.0
    %2535 = vmatpush.xpose.msra.mxu0 0.0
    %2536 = vmatpush.xpose.msra.mxu0 0.0
    %2537 = vmatpush.xpose.msra.mxu0 0.0
    %2538 = vmatpush.xpose.msra.mxu0 0.0
    %2539 = vmatpush.xpose.msra.mxu0 0.0
    %2540 = vmatpush.xpose.msra.mxu0 0.0
    %2541 = vmatpush.xpose.msra.mxu0 0.0
    %2542 = vmatpush.xpose.msra.mxu0 0.0
    %2543 = vmatpush.xpose.msra.mxu0 0.0
    %2544 = vmatpush.xpose.msra.mxu0 0.0
    %2545 = vmatpush.xpose.msra.mxu0 0.0
    %2546 = vmatpush.xpose.msra.mxu0 0.0
    %2547 = vmatpush.xpose.msra.mxu0 %v236
    %2548 = vmatmul.f32.gmra.mxu0 %v535
    %v2549 = vpop.f32.mrf.mxu0
    %v2550 = vadd.f32 %v2530, %v2549
    %2551 = vdwg.mxu0
    %vm2552 = vcmask 48128
    %2553 = vst.msk [vmem:[#allocation7] sm:$0xff] %vm2552, %v2550
    // Predicated region
    $region22: #{tpu_custom_call.1} parent=1 // pred_check
      _
    $region23: #{tpu_custom_call.1} parent=1 // pred_check_branch
      %2555 = sbr.rel (0) target = $region25
    $region24: #{tpu_custom_call.1} parent=1 // pred_region
      %2557 = vsyncadd [#allocation4], 96
      %s2558 = sshll.u32 [#allocation7], 4
      %s2559 = int_to_ptr.vmem [resolvable:$true] %s2558
      %s2560 = sshll.u32 %s3, 4
      %s2561 = int_to_ptr.hbm [resolvable:$true] %s2560
      %2566 = dma.vmem_to_hbm [thread:$0]  %s2559, 32, %s2561, [#allocation4], 32, 32, 2
    $region25: #{tpu_custom_call.1} parent=1 // pred_fallthru
      _
    // Predicated region
    $region26: #{tpu_custom_call.1} parent=1 // pred_check
      _
    $region27: #{tpu_custom_call.1} parent=1 // pred_check_branch
      %2568 = sbr.rel (0) target = $region29
    $region28: #{tpu_custom_call.1} parent=1 // pred_region
      %2570 = dma.done [#allocation4], 128
    $region29: #{tpu_custom_call.1} parent=1 // pred_fallthru
      _
    %2571 = vsyncpa [#allocation3], 1
    %2572 = vsyncpa [#allocation6], 1
    %2573 = vsyncpa [#allocation4], 1

</llo_original>
